<compile_context>
chip_gen: v7x
topology: tpu7x:2x2x1
jax: 0.10.0
libtpu: 0.0.40
codegen_flags: <defaults>
</compile_context>

<pallas_src>
import functools

import jax
import jax.numpy as jnp
from jax.experimental import pallas as pl
from jax.experimental.pallas import tpu as pltpu

BN_EPS = 1e-5


# ---------------------------------------------------------------------------
# Kernel 1: fused 1x1-Conv (on the avg-pooled activations) + BatchNorm + ReLU
# ---------------------------------------------------------------------------
def _conv1_bn_relu_kernel(a_ref, w1_ref, gamma_ref, beta_ref, o_ref):
    """a_ref: (M, Cin) bf16 avg-pooled activations, M = N*5*5
       (rows n-major, then (oi, oj) raster order).
    w1_ref: (Cin, 128) bf16 1x1-conv weight.
    gamma_ref / beta_ref: (1, 128) f32 BatchNorm affine parameters.
    o_ref: (M, 128) bf16 post-ReLU activations (lane-dense)."""
    y = jnp.dot(a_ref[...], w1_ref[...], preferred_element_type=jnp.float32)
    # Training-mode BatchNorm2d over the M = N*H*W rows.  Single-pass
    # statistics: var = E[y^2] - mean^2, biased variance, eps = 1e-5.
    # The conv1 bias is omitted by construction: the mean subtraction of
    # train-mode BN cancels it exactly.
    inv_m = 1.0 / y.shape[0]
    mean = jnp.sum(y, axis=0, keepdims=True) * inv_m
    var = jnp.sum(y * y, axis=0, keepdims=True) * inv_m - mean * mean
    scale = jax.lax.rsqrt(var + BN_EPS) * gamma_ref[...]
    h = (y - mean) * scale + beta_ref[...]
    o_ref[...] = jnp.maximum(h, 0.0).astype(o_ref.dtype)
    # TODO(synk): BatchNorm running_mean/running_var updates are training-time
    # side effects that do not affect this forward output; not modeled.


# ---------------------------------------------------------------------------
# Kernel 2: fused [Conv2d(128,768,5) + bias + Dropout(id) + Linear] as ONE
#           matmul against the precomputed combined weight W_comb.
# ---------------------------------------------------------------------------
def _head_kernel(h_ref, wc_ref, bc_ref, o_ref):
    """h_ref: (N, 3200) bf16 flattened conv1 activations (kh, kw, ic order).
    wc_ref: (3200, OUTP) bf16 combined (conv2 @ linear) weight, lane-padded.
    bc_ref: (1, OUTP) f32 combined bias (b2 @ W3 + b3), lane-padded.
    o_ref: (N, OUTP) f32 logits (lane-padded)."""
    # TODO(synk): Dropout(p=0.7) is a stochastic training-time op; eval-mode
    # (identity) behaviour is used, which is exactly what makes the
    # conv2 + linear collapse into a single matmul valid.
    out = jnp.dot(h_ref[...], wc_ref[...], preferred_element_type=jnp.float32)
    o_ref[...] = out + bc_ref[...]


# ---------------------------------------------------------------------------
# pallas_call helper: whole-array (no-grid) call, all operands VMEM-resident
# ---------------------------------------------------------------------------
def _vmem_call(kernel, n_in, out_shape):
    return pl.pallas_call(
        kernel,
        out_shape=out_shape,
        in_specs=[pl.BlockSpec(memory_space=pltpu.MemorySpace.VMEM)] * n_in,
        out_specs=pl.BlockSpec(memory_space=pltpu.MemorySpace.VMEM),
    )


# ---------------------------------------------------------------------------
# Parameters (deterministic, synthetic) and one-time device-side preparation
# ---------------------------------------------------------------------------
def init_params(key, in_channels, out_features):
    k1, k2, k3, k4, k5, k6, k7 = jax.random.split(key, 7)
    return {
        # BasicConvBlock(in_channels, 128, 1): the conv bias is intentionally
        # absent (exactly cancelled by train-mode BN mean subtraction).
        "conv1": dict(
            w=0.1 * jax.random.normal(k1, (in_channels, 128), jnp.float32),
            gamma=1.0 + 0.1 * jax.random.normal(k2, (128,), jnp.float32),
            beta=0.05 * jax.random.normal(k3, (128,), jnp.float32),
        ),
        # Conv2d(128, 768, kernel_size=5), weight stored HWIO (kh, kw, ic, oc).
        "conv2": dict(
            w=0.05 * jax.random.normal(k4, (5, 5, 128, 768), jnp.float32),
            b=0.01 * jax.random.normal(k5, (768,), jnp.float32),
        ),
        # Linear(768, out_features), weight stored (in, out).
        "linear": dict(
            w=0.05 * jax.random.normal(k6, (768, out_features), jnp.float32),
            b=0.01 * jax.random.normal(k7, (out_features,), jnp.float32),
        ),
    }


def prepare_params(params):
    """One-time weight repacking / algebraic folding (outside the per-step jit)."""
    c1, c2, lin = params["conv1"], params["conv2"], params["linear"]
    in_channels = c1["w"].shape[0]
    out_features = lin["w"].shape[1]
    outp = ((out_features + 127) // 128) * 128            # lane-dense width

    w1 = c1["w"].astype(jnp.bfloat16)                      # (Cin, 128)
    gamma = c1["gamma"].reshape(1, 128).astype(jnp.float32)
    beta = c1["beta"].reshape(1, 128).astype(jnp.float32)

    # Collapse conv2(5x5) + bias and the Linear into one matmul (valid because
    # Dropout is identity in eval mode and both ops are affine).
    w2_flat = c2["w"].reshape(5 * 5 * 128, 768)            # (3200, 768) f32
    wc = w2_flat @ lin["w"]                                # (3200, out) f32
    bc = c2["b"] @ lin["w"] + lin["b"]                     # (out,) f32

    wc_p = jnp.zeros((5 * 5 * 128, outp), jnp.bfloat16)
    wc_p = wc_p.at[:, :out_features].set(wc.astype(jnp.bfloat16))
    bc_p = jnp.zeros((1, outp), jnp.float32).at[0, :out_features].set(bc)

    return dict(w1=w1, gamma=gamma, beta=beta, wc=wc_p, bc=bc_p,
                in_channels=in_channels, out_features=out_features, outp=outp)


# ---------------------------------------------------------------------------
# InceptionAux forward
# ---------------------------------------------------------------------------
def inception_aux_forward(prep, x_nchw):
    x = jnp.transpose(x_nchw, (0, 2, 3, 1))                # NCHW -> NHWC, f32

    # AvgPool2d(kernel_size=5, stride=3) as a wrapper-side window reduction
    # (no 25x im2col materialization; the pooled tensor is ~11.5x smaller than
    # the input, so kernel-1 activation traffic shrinks ~25x vs patches).
    pooled = jax.lax.reduce_window(
        x, 0.0, jax.lax.add,
        window_dimensions=(1, 5, 5, 1),
        window_strides=(1, 3, 3, 1),
        padding="VALID") * (1.0 / 25.0)
    n, oh, ow, c = pooled.shape
    # The module's Linear(768) structurally requires a 5x5 pooled map
    # (conv2 5x5 valid -> 1x1 spatial -> 768 flattened features).
    assert (oh, ow) == (5, 5), (
        "InceptionAux requires a 5x5 avg-pooled map (e.g. 17x17 input)")

    a = pooled.reshape(n * oh * ow, c).astype(jnp.bfloat16)   # (N*25, Cin)

    # Kernel 1: 1x1 conv + train-mode BN + ReLU, output lane-dense (*,128).
    h = _vmem_call(
        _conv1_bn_relu_kernel, 4,
        jax.ShapeDtypeStruct((a.shape[0], 128), jnp.bfloat16),
    )(a, prep["w1"], prep["gamma"], prep["beta"])              # (N*25, 128)

    # Free contiguous HBM reshape: (N*25, 128) -> (N, 3200) in (kh, kw, ic)
    # order, matching the row layout of W_comb.
    h2 = h.reshape(n, oh * ow * 128)

    # Kernel 2: combined conv2+bias+dropout(id)+linear matmul.
    out_padded = _vmem_call(
        _head_kernel, 3,
        jax.ShapeDtypeStruct((n, prep["outp"]), jnp.float32),
    )(h2, prep["wc"], prep["bc"])                              # (N, OUTP)

    return out_padded[:, :prep["out_features"]]


if __name__ == "__main__":
    key = jax.random.PRNGKey(0)
    k_param, k_x = jax.random.split(key)

    batch = 2
    in_channels = 4
    spatial = 17       # avgpool(5, s=3) -> 5x5, conv2 5x5 -> 1x1 -> 768 feats
    out_features = 10

    params = init_params(k_param, in_channels, out_features)
    prep = prepare_params(params)

    x = jax.random.normal(
        k_x, (batch, in_channels, spatial, spatial), jnp.float32)  # NCHW

    fwd = jax.jit(functools.partial(inception_aux_forward, prep))
    out = fwd(x)
    jax.block_until_ready(out)

    assert out.shape == (batch, out_features), out.shape
    assert bool(jnp.all(jnp.isfinite(out)))
    print("KERNEL_OK")
</pallas_src>

<mosaic_0001>
module attributes {stable_mosaic.version = 11 : i64} {
  func.func @_head_kernel(%arg0: memref<2x3200xbf16, #tpu.memory_space<vmem>>, %arg1: memref<3200x128xbf16, #tpu.memory_space<vmem>>, %arg2: memref<1x128xf32, #tpu.memory_space<vmem>>, %arg3: memref<2x128xf32, #tpu.memory_space<vmem>>) attributes {dimension_semantics = [], scalar_prefetch = 0 : i64, scratch_operands = 0 : i64, tpu.core_type = #tpu.core_type<tc>} {
    %c0 = arith.constant 0 : index
    %c0_0 = arith.constant 0 : index
    %0 = vector.load %arg0[%c0, %c0_0] : memref<2x3200xbf16, #tpu.memory_space<vmem>>, vector<2x3200xbf16>
    %c0_1 = arith.constant 0 : index
    %c0_2 = arith.constant 0 : index
    %1 = vector.load %arg1[%c0_1, %c0_2] : memref<3200x128xbf16, #tpu.memory_space<vmem>>, vector<3200x128xbf16>
    %cst = arith.constant dense<0.000000e+00> : vector<2x128xf32>
    %2 = tpu.matmul %0, %1, %cst {dimension_numbers = #tpu.dot_dimension_numbers<[1], [0], [0], [1], [0, 0, 1, 1], [], []>} : vector<2x3200xbf16>, vector<3200x128xbf16>, vector<2x128xf32> -> vector<2x128xf32>
    %c0_3 = arith.constant 0 : index
    %c0_4 = arith.constant 0 : index
    %3 = vector.load %arg2[%c0_3, %c0_4] : memref<1x128xf32, #tpu.memory_space<vmem>>, vector<1x128xf32>
    %4 = vector.broadcast %3 : vector<1x128xf32> to vector<2x128xf32>
    %5 = arith.addf %2, %4 : vector<2x128xf32>
    %c0_5 = arith.constant 0 : index
    %c0_6 = arith.constant 0 : index
    %6 = vector.load %arg3[%c0_5, %c0_6] : memref<2x128xf32, #tpu.memory_space<vmem>>, vector<2x128xf32>
    tpu.vector_store %arg3[%c0_5, %c0_6], %5 {strides = array<i32>} : memref<2x128xf32, #tpu.memory_space<vmem>>, vector<2x128xf32>,
    return
  }
}

module attributes {stable_mosaic.version = 11 : i64} {
  func.func @_conv1_bn_relu_kernel(%arg0: memref<50x4xbf16, #tpu.memory_space<vmem>>, %arg1: memref<4x128xbf16, #tpu.memory_space<vmem>>, %arg2: memref<1x128xf32, #tpu.memory_space<vmem>>, %arg3: memref<1x128xf32, #tpu.memory_space<vmem>>, %arg4: memref<50x128xbf16, #tpu.memory_space<vmem>>) attributes {dimension_semantics = [], scalar_prefetch = 0 : i64, scratch_operands = 0 : i64, tpu.core_type = #tpu.core_type<tc>} {
    %c0 = arith.constant 0 : index
    %c0_0 = arith.constant 0 : index
    %0 = vector.load %arg0[%c0, %c0_0] : memref<50x4xbf16, #tpu.memory_space<vmem>>, vector<50x4xbf16>
    %c0_1 = arith.constant 0 : index
    %c0_2 = arith.constant 0 : index
    %1 = vector.load %arg1[%c0_1, %c0_2] : memref<4x128xbf16, #tpu.memory_space<vmem>>, vector<4x128xbf16>
    %cst = arith.constant dense<0.000000e+00> : vector<50x128xf32>
    %2 = tpu.matmul %0, %1, %cst {dimension_numbers = #tpu.dot_dimension_numbers<[1], [0], [0], [1], [0, 0, 1, 1], [], []>} : vector<50x4xbf16>, vector<4x128xbf16>, vector<50x128xf32> -> vector<50x128xf32>
    %cst_3 = arith.constant dense<0.000000e+00> : vector<128xf32>
    %3 = vector.multi_reduction <add>, %2, %cst_3 [0] : vector<50x128xf32> to vector<128xf32>
    %4 = vector.shape_cast %3 : vector<128xf32> to vector<1x128xf32>
    %cst_4 = arith.constant 2.000000e-02 : f32
    %5 = vector.broadcast %cst_4 : f32 to vector<1x128xf32>
    %6 = arith.mulf %4, %5 : vector<1x128xf32>
    %7 = arith.mulf %2, %2 : vector<50x128xf32>
    %cst_5 = arith.constant dense<0.000000e+00> : vector<128xf32>
    %8 = vector.multi_reduction <add>, %7, %cst_5 [0] : vector<50x128xf32> to vector<128xf32>
    %9 = vector.shape_cast %8 : vector<128xf32> to vector<1x128xf32>
    %cst_6 = arith.constant 2.000000e-02 : f32
    %10 = vector.broadcast %cst_6 : f32 to vector<1x128xf32>
    %11 = arith.mulf %9, %10 : vector<1x128xf32>
    %12 = arith.mulf %6, %6 : vector<1x128xf32>
    %13 = arith.subf %11, %12 : vector<1x128xf32>
    %cst_7 = arith.constant 9.99999974E-6 : f32
    %14 = vector.broadcast %cst_7 : f32 to vector<1x128xf32>
    %15 = arith.addf %13, %14 : vector<1x128xf32>
    %16 = math.rsqrt %15 : vector<1x128xf32>
    %c0_8 = arith.constant 0 : index
    %c0_9 = arith.constant 0 : index
    %17 = vector.load %arg2[%c0_8, %c0_9] : memref<1x128xf32, #tpu.memory_space<vmem>>, vector<1x128xf32>
    %18 = arith.mulf %16, %17 : vector<1x128xf32>
    %19 = vector.broadcast %6 : vector<1x128xf32> to vector<50x128xf32>
    %20 = arith.subf %2, %19 : vector<50x128xf32>
    %21 = vector.broadcast %18 : vector<1x128xf32> to vector<50x128xf32>
    %22 = arith.mulf %20, %21 : vector<50x128xf32>
    %c0_10 = arith.constant 0 : index
    %c0_11 = arith.constant 0 : index
    %23 = vector.load %arg3[%c0_10, %c0_11] : memref<1x128xf32, #tpu.memory_space<vmem>>, vector<1x128xf32>
    %24 = vector.broadcast %23 : vector<1x128xf32> to vector<50x128xf32>
    %25 = arith.addf %22, %24 : vector<50x128xf32>
    %cst_12 = arith.constant 0.000000e+00 : f32
    %26 = vector.broadcast %cst_12 : f32 to vector<50x128xf32>
    %27 = arith.maximumf %25, %26 : vector<50x128xf32>
    %28 = arith.truncf %27 : vector<50x128xf32> to vector<50x128xbf16>
    %c0_13 = arith.constant 0 : index
    %c0_14 = arith.constant 0 : index
    %29 = vector.load %arg4[%c0_13, %c0_14] : memref<50x128xbf16, #tpu.memory_space<vmem>>, vector<50x128xbf16>
    tpu.vector_store %arg4[%c0_13, %c0_14], %28 {strides = array<i32>} : memref<50x128xbf16, #tpu.memory_space<vmem>>, vector<50x128xbf16>,
    return
  }
}

</mosaic_0001>

<llo_original>
// kernel: inception_aux_forward.2
$region0: #{inception_aux_forward.2}
  #allocation0 [shape = 'u32[]', space=smem, size = 0x4, offset = 0x4, fixed_abs, tag = 'smem constant byte address 0x4 - core index']
  #allocation1 [shape = 'u32[144,128]{1,0:T(1,128)}', space=vmem, size = 0x12000, scoped, tag = 'internal scratch']
  %s0 = inlined_call_operand.vmem [shape: bf16[50,4], index: 0, kind: input, shape index: {}]
  %s1 = inlined_call_operand.vmem [shape: bf16[4,128], index: 1, kind: input, shape index: {}]
  %s2 = inlined_call_operand.vmem [shape: f32[1,128], index: 2, kind: input, shape index: {}]
  %s3 = inlined_call_operand.vmem [shape: f32[1,128], index: 3, kind: input, shape index: {}]
  %s4 = inlined_call_operand.vmem [shape: bf16[50,128], index: 4, kind: output, shape index: {}]
  %s5 = sld [smem:[#allocation0]]
  $region26: #{inception_aux_forward.2} parent=0
    _
  %s7 = ssub.s32 1, %s5
  %s8 = scalar_select 0, %s7, %s5
  // Predicated region
  $region2: #{inception_aux_forward.2} parent=0 // pred_check
    _
  $region3: #{inception_aux_forward.2} parent=0 // pred_check_branch
    %10 = sbr.rel (0) target = $region5
  $region4: #{inception_aux_forward.2} parent=0 // pred_region
    _
  $region5: #{inception_aux_forward.2} parent=0 // pred_fallthru
    _
  // Predicated region
  $region6: #{inception_aux_forward.2} parent=0 // pred_check
    _
  $region7: #{inception_aux_forward.2} parent=0 // pred_check_branch
    %12 = sbr.rel (0) target = $region9
  $region8: #{inception_aux_forward.2} parent=0 // pred_region
    _
  $region9: #{inception_aux_forward.2} parent=0 // pred_fallthru
    _
  // Predicated region
  $region10: #{inception_aux_forward.2} parent=0 // pred_check
    _
  $region11: #{inception_aux_forward.2} parent=0 // pred_check_branch
    %14 = sbr.rel (0) target = $region13
  $region12: #{inception_aux_forward.2} parent=0 // pred_region
    _
  $region13: #{inception_aux_forward.2} parent=0 // pred_fallthru
    _
  // Predicated region
  $region14: #{inception_aux_forward.2} parent=0 // pred_check
    _
  $region15: #{inception_aux_forward.2} parent=0 // pred_check_branch
    %16 = sbr.rel (0) target = $region17
  $region16: #{inception_aux_forward.2} parent=0 // pred_region
    _
  $region17: #{inception_aux_forward.2} parent=0 // pred_fallthru
    _
  %v18 = vld [vmem:[%s0] sm:$0xf]
  %v19 = vld [vmem:[%s0 + $0x4] sm:$0xf]
  %v20 = vld [vmem:[%s0 + $0x8] sm:$0xf]
  %v21 = vld [vmem:[%s0 + $0xc] sm:$0xf]
  %v22 = vld [vmem:[%s0 + $0x10] sm:$0xf]
  %v23 = vld [vmem:[%s0 + $0x14] sm:$0xf]
  %v24 = vld [vmem:[%s0 + $0x18] sm:$0x1]
  %v25 = vld [vmem:[%s1] sm:$0x3]
  %v33 = vunpack.c.l.b16 %v18
  %v34 = vunpack.c.l.b16 %v19
  %v35 = vunpack.c.l.b16 %v20
  %v36 = vunpack.c.l.b16 %v21
  %v37 = vunpack.c.l.b16 %v22
  %v38 = vunpack.c.l.b16 %v23
  %v39 = vunpack.c.l.b16 %v24
  %v40 = vpack.c.b16 %v34, %v33
  %v41 = vpack.c.b16 %v36, %v35
  %v42 = vpack.c.b16 %v38, %v37
  %v43 = vpack.c.b16 %v39, %v39
  %vm44 = vcmask 31744
  %v46 = vsel %vm44, %v40, 0
  %v49 = vsel %vm44, %v41, 0
  %v52 = vsel %vm44, %v42, 0
  %v55 = vsel %vm44, %v43, 0
  %vm57 = vcmask 1041408
  %v59 = vsel %vm57, %v25, 0
  %61 = vmatprep.subr.bf16.mxu0 0
  %62 = vmatpush1.bf16.msra.mxu0 %v59
  %63 = vmatprep.subr.bf16.mxu0 0
  %64 = vmatpush1.bf16.msra.mxu0 0
  %65 = vmatprep.subr.bf16.mxu0 0
  %66 = vmatpush1.bf16.msra.mxu0 0
  %67 = vmatprep.subr.bf16.mxu0 0
  %68 = vmatpush1.bf16.msra.mxu0 0
  %69 = vmatprep.subr.bf16.mxu0 0
  %70 = vmatpush1.bf16.msra.mxu0 0
  %71 = vmatprep.subr.bf16.mxu0 0
  %72 = vmatpush1.bf16.msra.mxu0 0
  %73 = vmatprep.subr.bf16.mxu0 0
  %74 = vmatpush1.bf16.msra.mxu0 0
  %75 = vmatprep.subr.bf16.mxu0 0
  %76 = vmatpush1.bf16.msra.mxu0 0
  %77 = vmatprep.subr.bf16.mxu0 0
  %78 = vmatpush1.bf16.msra.mxu0 0
  %79 = vmatprep.subr.bf16.mxu0 0
  %80 = vmatpush1.bf16.msra.mxu0 0
  %81 = vmatprep.subr.bf16.mxu0 0
  %82 = vmatpush1.bf16.msra.mxu0 0
  %83 = vmatprep.subr.bf16.mxu0 0
  %84 = vmatpush1.bf16.msra.mxu0 0
  %85 = vmatprep.subr.bf16.mxu0 0
  %86 = vmatpush1.bf16.msra.mxu0 0
  %87 = vmatprep.subr.bf16.mxu0 0
  %88 = vmatpush1.bf16.msra.mxu0 0
  %89 = vmatprep.subr.bf16.mxu0 0
  %90 = vmatpush1.bf16.msra.mxu0 0
  %91 = vmatprep.subr.bf16.mxu0 0
  %92 = vmatpush1.bf16.msra.mxu0 0
  %93 = vmatprep.mubr.bf16.mxu0 0
  %94 = vmatmul.mubr.bf16.gmra.mrb[0].mxu0 %v46
  %v95 = vpop.f32.mrb[0].mxu0
  %v96 = vadd.f32 0.0, %v95
  %v97 = vpop.f32.mrb[0].mxu0
  %v98 = vpop.f32.mrb[0].mxu0
  %v99 = vadd.f32 0.0, %v98
  %v100 = vpop.f32.mrb[0].mxu0
  %101 = vmatprep.mubr.bf16.mxu0 0
  %102 = vmatmul.mubr.bf16.gmra.mrb[0].mxu0 %v49
  %v103 = vpop.f32.mrb[0].mxu0
  %v104 = vadd.f32 0.0, %v103
  %v105 = vpop.f32.mrb[0].mxu0
  %v106 = vpop.f32.mrb[0].mxu0
  %v107 = vadd.f32 0.0, %v106
  %v108 = vpop.f32.mrb[0].mxu0
  %109 = vmatprep.mubr.bf16.mxu0 0
  %110 = vmatmul.mubr.bf16.gmra.mrb[0].mxu0 %v52
  %v111 = vpop.f32.mrb[0].mxu0
  %v112 = vadd.f32 0.0, %v111
  %v113 = vpop.f32.mrb[0].mxu0
  %v114 = vpop.f32.mrb[0].mxu0
  %v115 = vadd.f32 0.0, %v114
  %v116 = vpop.f32.mrb[0].mxu0
  %117 = vmatprep.mubr.bf16.mxu0 0
  %118 = vmatmul.mubr.bf16.gmra.mrb[0].mxu0 %v55
  %v119 = vpop.f32.mrb[0].mxu0
  %v120 = vadd.f32 0.0, %v119
  %v121 = vpop.f32.mrb[0].mxu0
  %v122 = vpop.f32.mrb[0].mxu0
  %v123 = vpop.f32.mrb[0].mxu0
  %124 = vdwg.mxu0
  %v125 = vadd.f32 %v96, %v99
  %v126 = vadd.f32 %v125, %v104
  %v127 = vadd.f32 %v126, %v107
  %v128 = vadd.f32 %v127, %v112
  %v129 = vadd.f32 %v128, %v115
  %v130 = vsel %vm57, %v120, 0.0
  %v131 = vadd.f32 %v129, %v130
  %v132 = vrot.slane %v131, 4
  %v133 = vadd.f32 %v131, %v132
  %v134 = vrot.slane %v133, 2
  %v135 = vadd.f32 %v133, %v134
  %v136 = vrot.slane %v135, 1
  %v137 = vadd.f32 %v135, %v136
  %v138 = vmul.f32 %v137, 0.02
  %v139 = vmul.f32 %v96, %v96
  %v140 = vmul.f32 %v99, %v99
  %v141 = vmul.f32 %v104, %v104
  %v142 = vmul.f32 %v107, %v107
  %v143 = vmul.f32 %v112, %v112
  %v144 = vmul.f32 %v115, %v115
  %v145 = vmul.f32 %v120, %v120
  %v146 = vadd.f32 %v139, %v140
  %v147 = vadd.f32 %v146, %v141
  %v148 = vadd.f32 %v147, %v142
  %v149 = vadd.f32 %v148, %v143
  %v150 = vadd.f32 %v149, %v144
  %v151 = vsel %vm57, %v145, 0.0
  %v152 = vadd.f32 %v150, %v151
  %v153 = vrot.slane %v152, 4
  %v154 = vadd.f32 %v152, %v153
  %v155 = vrot.slane %v154, 2
  %v156 = vadd.f32 %v154, %v155
  %v157 = vrot.slane %v156, 1
  %v158 = vadd.f32 %v156, %v157
  %v159 = vmul.f32 %v158, 0.02
  %v160 = vmul.f32 %v138, %v138
  %v161 = vsub.f32 %v159, %v160
  %v162 = vadd.f32 %v161, 1e-05
  %v163 = vrsqrt.pop %v162
  %v164 = vld [vmem:[%s2] sm:$0x1]
  %v165 = vmul.f32 %v163, %v164
  %v166 = vsub.f32 %v96, %v138
  %v167 = vsub.f32 %v99, %v138
  %v168 = vsub.f32 %v104, %v138
  %v169 = vsub.f32 %v107, %v138
  %v170 = vsub.f32 %v112, %v138
  %v171 = vsub.f32 %v115, %v138
  %v172 = vsub.f32 %v120, %v138
  %v173 = vlaneseq
  %v174 = vshrl.u32 %v173, 7
  %v175 = vsub.s32 0, %v174
  %v176 = vrot.slane %v165, %v175
  %v177 = vmul.f32 %v166, %v176
  %v178 = vmul.f32 %v167, %v176
  %v179 = vmul.f32 %v168, %v176
  %v180 = vmul.f32 %v169, %v176
  %v181 = vmul.f32 %v170, %v176
  %v182 = vmul.f32 %v171, %v176
  %v183 = vmul.f32 %v172, %v176
  %v184 = vld [vmem:[%s3] sm:$0x1]
  %v186 = vlaneseq
  %v187 = vshrl.u32 %v186, 7
  %v188 = vsub.s32 0, %v187
  %v189 = vrot.slane %v184, %v188
  %v191 = vadd.f32 %v177, %v189
  %v192 = vadd.f32 %v178, %v189
  %v193 = vadd.f32 %v179, %v189
  %v194 = vadd.f32 %v180, %v189
  %v195 = vadd.f32 %v181, %v189
  %v196 = vadd.f32 %v182, %v189
  %v197 = vadd.f32 %v183, %v189
  %v198 = vmax.f32 %v191, 0.0
  %v199 = vmax.f32 %v192, 0.0
  %v200 = vmax.f32 %v193, 0.0
  %v201 = vmax.f32 %v194, 0.0
  %v202 = vmax.f32 %v195, 0.0
  %v203 = vmax.f32 %v196, 0.0
  %v204 = vmax.f32 %v197, 0.0
  %v205 = vpack.c.bf16 %v199, %v198
  %v206 = vpack.c.bf16 %v201, %v200
  %v207 = vpack.c.bf16 %v203, %v202
  %v208 = vpack.c.bf16 %v204, %v204
  %v213 = vunpack.c.l.b16 %v205
  %v214 = vunpack.c.h.b16 %v205
  %v215 = vunpack.c.l.b16 %v206
  %v216 = vunpack.c.h.b16 %v206
  %v217 = vunpack.c.l.b16 %v207
  %v218 = vunpack.c.h.b16 %v207
  %v219 = vunpack.c.l.b16 %v208
  %v220 = vpack.c.b16 %v213, %v213
  %v221 = vpack.c.b16 %v214, %v214
  %v222 = vpack.c.b16 %v215, %v215
  %v223 = vpack.c.b16 %v216, %v216
  %v224 = vpack.c.b16 %v217, %v217
  %v225 = vpack.c.b16 %v218, %v218
  %v226 = vpack.c.b16 %v219, %v219
  %234 = vst [vmem:[%s4] sm:$0xf] %v220
  %235 = vst [vmem:[%s4 + $0x4] sm:$0xf] %v221
  %236 = vst [vmem:[%s4 + $0x8] sm:$0xf] %v222
  %237 = vst [vmem:[%s4 + $0xc] sm:$0xf] %v223
  %238 = vst [vmem:[%s4 + $0x10] sm:$0xf] %v224
  %239 = vst [vmem:[%s4 + $0x14] sm:$0xf] %v225
  %240 = vst [vmem:[%s4 + $0x18] sm:$0x1] %v226
  // Predicated region
  $region18: #{inception_aux_forward.2} parent=0 // pred_check
    _
  $region19: #{inception_aux_forward.2} parent=0 // pred_check_branch
    %242 = sbr.rel (0) target = $region21
  $region20: #{inception_aux_forward.2} parent=0 // pred_region
    _
  $region21: #{inception_aux_forward.2} parent=0 // pred_fallthru
    _
  // Predicated region
  $region22: #{inception_aux_forward.2} parent=0 // pred_check
    _
  $region23: #{inception_aux_forward.2} parent=0 // pred_check_branch
    %244 = sbr.rel (0) target = $region25
  $region24: #{inception_aux_forward.2} parent=0 // pred_region
    _
  $region25: #{inception_aux_forward.2} parent=0 // pred_fallthru
    _

// kernel: inception_aux_forward.3
$region0: #{inception_aux_forward.3}
  #allocation0 [shape = 'u32[]', space=smem, size = 0x4, offset = 0x4, fixed_abs, tag = 'smem constant byte address 0x4 - core index']
  #allocation1 [shape = 'u32[144,128]{1,0:T(1,128)}', space=vmem, size = 0x12000, scoped, tag = 'internal scratch']
  %s0 = inlined_call_operand.vmem [shape: bf16[2,3200], index: 0, kind: input, shape index: {}]
  %s1 = inlined_call_operand.hbm [shape: bf16[3200,128], index: 1, kind: input, shape index: {}]
  %s2 = inlined_call_operand.vmem [shape: f32[1,128], index: 2, kind: input, shape index: {}]
  %s3 = inlined_call_operand.hbm [shape: f32[2,128], index: 3, kind: output, shape index: {}]
  %s4 = sld [smem:[#allocation0]]
  $region26: #{inception_aux_forward.3} parent=0
    _
  %s6 = ssub.s32 1, %s4
  %s7 = scalar_select 0, %s6, %s4
  $region1: #{inception_aux_forward.3} parent=0
    #allocation2 [shape = 'u8[819200]{0}', space=vmem, size = 0xc8000, scoped, tag = 'input window, operand 1, single buffered']
    #allocation3 [shape = 's32[1]{0}', space=sflag, size = 0x4, scoped, tag = 'scoped memory for inception_aux_forward.3']
    #allocation4 [shape = 's32[1]{0}', space=sflag, size = 0x4, scoped, tag = 'scoped memory for inception_aux_forward.3']
    #allocation5 [shape = 'u8[1024]{0}', space=vmem, size = 0x400, scoped, tag = 'output window, operand 0, single buffered']
    %8 = vsyncpa [#allocation3], 0
    %9 = vsyncpa [#allocation4], 0
    // Predicated region
    $region2: #{inception_aux_forward.3} parent=1 // pred_check
      _
    $region3: #{inception_aux_forward.3} parent=1 // pred_check_branch
      %11 = sbr.rel (0) target = $region5
    $region4: #{inception_aux_forward.3} parent=1 // pred_region
      _
    $region5: #{inception_aux_forward.3} parent=1 // pred_fallthru
      _
    // Predicated region
    $region6: #{inception_aux_forward.3} parent=1 // pred_check
      _
    $region7: #{inception_aux_forward.3} parent=1 // pred_check_branch
      %13 = sbr.rel (0) target = $region9
    $region8: #{inception_aux_forward.3} parent=1 // pred_region
      %s15 = ssub.s32 25600, 25600
      %16 = vsyncadd [#allocation3], %s15
      %s17 = sshll.u32 [#allocation2], 4
      %s18 = int_to_ptr.vmem [resolvable:$true] %s17
      %23 = dma.hbm_to_vmem [thread:$0]  %s1, 25600, %s18, [#allocation3], 64, 64, 4
    $region9: #{inception_aux_forward.3} parent=1 // pred_fallthru
      _
    // Predicated region
    $region10: #{inception_aux_forward.3} parent=1 // pred_check
      _
    $region11: #{inception_aux_forward.3} parent=1 // pred_check_branch
      %25 = sbr.rel (0) target = $region13
    $region12: #{inception_aux_forward.3} parent=1 // pred_region
      _
    $region13: #{inception_aux_forward.3} parent=1 // pred_fallthru
      _
    // Predicated region
    $region14: #{inception_aux_forward.3} parent=1 // pred_check
      _
    $region15: #{inception_aux_forward.3} parent=1 // pred_check_branch
      %27 = sbr.rel (0) target = $region17
    $region16: #{inception_aux_forward.3} parent=1 // pred_region
      %28 = dma.done [#allocation3], 25600
    $region17: #{inception_aux_forward.3} parent=1 // pred_fallthru
      _
    %v30 = vld [vmem:[%s0] sm:$0xff]
    %v31 = vld [vmem:[%s0 + $0x8] sm:$0xff]
    %v32 = vld [vmem:[%s0 + $0x10] sm:$0xff]
    %v33 = vld [vmem:[%s0 + $0x18] sm:$0x1]
    %v34 = vld [vmem:[#allocation2] sm:$0xf]
    %v35 = vld [vmem:[#allocation2 + $0x4] sm:$0xf]
    %v36 = vld [vmem:[#allocation2 + $0x8] sm:$0xf]
    %v37 = vld [vmem:[#allocation2 + $0xc] sm:$0xf]
    %v38 = vld [vmem:[#allocation2 + $0x10] sm:$0xf]
    %v39 = vld [vmem:[#allocation2 + $0x14] sm:$0xf]
    %v40 = vld [vmem:[#allocation2 + $0x18] sm:$0xf]
    %v41 = vld [vmem:[#allocation2 + $0x1c] sm:$0xf]
    %v42 = vld [vmem:[#allocation2 + $0x20] sm:$0xf]
    %v43 = vld [vmem:[#allocation2 + $0x24] sm:$0xf]
    %v44 = vld [vmem:[#allocation2 + $0x28] sm:$0xf]
    %v45 = vld [vmem:[#allocation2 + $0x2c] sm:$0xf]
    %v46 = vld [vmem:[#allocation2 + $0x30] sm:$0xf]
    %v47 = vld [vmem:[#allocation2 + $0x34] sm:$0xf]
    %v48 = vld [vmem:[#allocation2 + $0x38] sm:$0xf]
    %v49 = vld [vmem:[#allocation2 + $0x3c] sm:$0xf]
    %v50 = vld [vmem:[#allocation2 + $0x40] sm:$0xf]
    %v51 = vld [vmem:[#allocation2 + $0x44] sm:$0xf]
    %v52 = vld [vmem:[#allocation2 + $0x48] sm:$0xf]
    %v53 = vld [vmem:[#allocation2 + $0x4c] sm:$0xf]
    %v54 = vld [vmem:[#allocation2 + $0x50] sm:$0xf]
    %v55 = vld [vmem:[#allocation2 + $0x54] sm:$0xf]
    %v56 = vld [vmem:[#allocation2 + $0x58] sm:$0xf]
    %v57 = vld [vmem:[#allocation2 + $0x5c] sm:$0xf]
    %v58 = vld [vmem:[#allocation2 + $0x60] sm:$0xf]
    %v59 = vld [vmem:[#allocation2 + $0x64] sm:$0xf]
    %v60 = vld [vmem:[#allocation2 + $0x68] sm:$0xf]
    %v61 = vld [vmem:[#allocation2 + $0x6c] sm:$0xf]
    %v62 = vld [vmem:[#allocation2 + $0x70] sm:$0xf]
    %v63 = vld [vmem:[#allocation2 + $0x74] sm:$0xf]
    %v64 = vld [vmem:[#allocation2 + $0x78] sm:$0xf]
    %v65 = vld [vmem:[#allocation2 + $0x7c] sm:$0xf]
    %v66 = vld [vmem:[#allocation2 + $0x80] sm:$0xf]
    %v67 = vld [vmem:[#allocation2 + $0x84] sm:$0xf]
    %v68 = vld [vmem:[#allocation2 + $0x88] sm:$0xf]
    %v69 = vld [vmem:[#allocation2 + $0x8c] sm:$0xf]
    %v70 = vld [vmem:[#allocation2 + $0x90] sm:$0xf]
    %v71 = vld [vmem:[#allocation2 + $0x94] sm:$0xf]
    %v72 = vld [vmem:[#allocation2 + $0x98] sm:$0xf]
    %v73 = vld [vmem:[#allocation2 + $0x9c] sm:$0xf]
    %v74 = vld [vmem:[#allocation2 + $0xa0] sm:$0xf]
    %v75 = vld [vmem:[#allocation2 + $0xa4] sm:$0xf]
    %v76 = vld [vmem:[#allocation2 + $0xa8] sm:$0xf]
    %v77 = vld [vmem:[#allocation2 + $0xac] sm:$0xf]
    %v78 = vld [vmem:[#allocation2 + $0xb0] sm:$0xf]
    %v79 = vld [vmem:[#allocation2 + $0xb4] sm:$0xf]
    %v80 = vld [vmem:[#allocation2 + $0xb8] sm:$0xf]
    %v81 = vld [vmem:[#allocation2 + $0xbc] sm:$0xf]
    %v82 = vld [vmem:[#allocation2 + $0xc0] sm:$0xf]
    %v83 = vld [vmem:[#allocation2 + $0xc4] sm:$0xf]
    %v84 = vld [vmem:[#allocation2 + $0xc8] sm:$0xf]
    %v85 = vld [vmem:[#allocation2 + $0xcc] sm:$0xf]
    %v86 = vld [vmem:[#allocation2 + $0xd0] sm:$0xf]
    %v87 = vld [vmem:[#allocation2 + $0xd4] sm:$0xf]
    %v88 = vld [vmem:[#allocation2 + $0xd8] sm:$0xf]
    %v89 = vld [vmem:[#allocation2 + $0xdc] sm:$0xf]
    %v90 = vld [vmem:[#allocation2 + $0xe0] sm:$0xf]
    %v91 = vld [vmem:[#allocation2 + $0xe4] sm:$0xf]
    %v92 = vld [vmem:[#allocation2 + $0xe8] sm:$0xf]
    %v93 = vld [vmem:[#allocation2 + $0xec] sm:$0xf]
    %v94 = vld [vmem:[#allocation2 + $0xf0] sm:$0xf]
    %v95 = vld [vmem:[#allocation2 + $0xf4] sm:$0xf]
    %v96 = vld [vmem:[#allocation2 + $0xf8] sm:$0xf]
    %v97 = vld [vmem:[#allocation2 + $0xfc] sm:$0xf]
    %v98 = vld [vmem:[#allocation2 + $0x100] sm:$0xf]
    %v99 = vld [vmem:[#allocation2 + $0x104] sm:$0xf]
    %v100 = vld [vmem:[#allocation2 + $0x108] sm:$0xf]
    %v101 = vld [vmem:[#allocation2 + $0x10c] sm:$0xf]
    %v102 = vld [vmem:[#allocation2 + $0x110] sm:$0xf]
    %v103 = vld [vmem:[#allocation2 + $0x114] sm:$0xf]
    %v104 = vld [vmem:[#allocation2 + $0x118] sm:$0xf]
    %v105 = vld [vmem:[#allocation2 + $0x11c] sm:$0xf]
    %v106 = vld [vmem:[#allocation2 + $0x120] sm:$0xf]
    %v107 = vld [vmem:[#allocation2 + $0x124] sm:$0xf]
    %v108 = vld [vmem:[#allocation2 + $0x128] sm:$0xf]
    %v109 = vld [vmem:[#allocation2 + $0x12c] sm:$0xf]
    %v110 = vld [vmem:[#allocation2 + $0x130] sm:$0xf]
    %v111 = vld [vmem:[#allocation2 + $0x134] sm:$0xf]
    %v112 = vld [vmem:[#allocation2 + $0x138] sm:$0xf]
    %v113 = vld [vmem:[#allocation2 + $0x13c] sm:$0xf]
    %v114 = vld [vmem:[#allocation2 + $0x140] sm:$0xf]
    %v115 = vld [vmem:[#allocation2 + $0x144] sm:$0xf]
    %v116 = vld [vmem:[#allocation2 + $0x148] sm:$0xf]
    %v117 = vld [vmem:[#allocation2 + $0x14c] sm:$0xf]
    %v118 = vld [vmem:[#allocation2 + $0x150] sm:$0xf]
    %v119 = vld [vmem:[#allocation2 + $0x154] sm:$0xf]
    %v120 = vld [vmem:[#allocation2 + $0x158] sm:$0xf]
    %v121 = vld [vmem:[#allocation2 + $0x15c] sm:$0xf]
    %v122 = vld [vmem:[#allocation2 + $0x160] sm:$0xf]
    %v123 = vld [vmem:[#allocation2 + $0x164] sm:$0xf]
    %v124 = vld [vmem:[#allocation2 + $0x168] sm:$0xf]
    %v125 = vld [vmem:[#allocation2 + $0x16c] sm:$0xf]
    %v126 = vld [vmem:[#allocation2 + $0x170] sm:$0xf]
    %v127 = vld [vmem:[#allocation2 + $0x174] sm:$0xf]
    %v128 = vld [vmem:[#allocation2 + $0x178] sm:$0xf]
    %v129 = vld [vmem:[#allocation2 + $0x17c] sm:$0xf]
    %v130 = vld [vmem:[#allocation2 + $0x180] sm:$0xf]
    %v131 = vld [vmem:[#allocation2 + $0x184] sm:$0xf]
    %v132 = vld [vmem:[#allocation2 + $0x188] sm:$0xf]
    %v133 = vld [vmem:[#allocation2 + $0x18c] sm:$0xf]
    %v134 = vld [vmem:[#allocation2 + $0x190] sm:$0xf]
    %v135 = vld [vmem:[#allocation2 + $0x194] sm:$0xf]
    %v136 = vld [vmem:[#allocation2 + $0x198] sm:$0xf]
    %v137 = vld [vmem:[#allocation2 + $0x19c] sm:$0xf]
    %v138 = vld [vmem:[#allocation2 + $0x1a0] sm:$0xf]
    %v139 = vld [vmem:[#allocation2 + $0x1a4] sm:$0xf]
    %v140 = vld [vmem:[#allocation2 + $0x1a8] sm:$0xf]
    %v141 = vld [vmem:[#allocation2 + $0x1ac] sm:$0xf]
    %v142 = vld [vmem:[#allocation2 + $0x1b0] sm:$0xf]
    %v143 = vld [vmem:[#allocation2 + $0x1b4] sm:$0xf]
    %v144 = vld [vmem:[#allocation2 + $0x1b8] sm:$0xf]
    %v145 = vld [vmem:[#allocation2 + $0x1bc] sm:$0xf]
    %v146 = vld [vmem:[#allocation2 + $0x1c0] sm:$0xf]
    %v147 = vld [vmem:[#allocation2 + $0x1c4] sm:$0xf]
    %v148 = vld [vmem:[#allocation2 + $0x1c8] sm:$0xf]
    %v149 = vld [vmem:[#allocation2 + $0x1cc] sm:$0xf]
    %v150 = vld [vmem:[#allocation2 + $0x1d0] sm:$0xf]
    %v151 = vld [vmem:[#allocation2 + $0x1d4] sm:$0xf]
    %v152 = vld [vmem:[#allocation2 + $0x1d8] sm:$0xf]
    %v153 = vld [vmem:[#allocation2 + $0x1dc] sm:$0xf]
    %v154 = vld [vmem:[#allocation2 + $0x1e0] sm:$0xf]
    %v155 = vld [vmem:[#allocation2 + $0x1e4] sm:$0xf]
    %v156 = vld [vmem:[#allocation2 + $0x1e8] sm:$0xf]
    %v157 = vld [vmem:[#allocation2 + $0x1ec] sm:$0xf]
    %v158 = vld [vmem:[#allocation2 + $0x1f0] sm:$0xf]
    %v159 = vld [vmem:[#allocation2 + $0x1f4] sm:$0xf]
    %v160 = vld [vmem:[#allocation2 + $0x1f8] sm:$0xf]
    %v161 = vld [vmem:[#allocation2 + $0x1fc] sm:$0xf]
    %v162 = vld [vmem:[#allocation2 + $0x200] sm:$0xf]
    %v163 = vld [vmem:[#allocation2 + $0x204] sm:$0xf]
    %v164 = vld [vmem:[#allocation2 + $0x208] sm:$0xf]
    %v165 = vld [vmem:[#allocation2 + $0x20c] sm:$0xf]
    %v166 = vld [vmem:[#allocation2 + $0x210] sm:$0xf]
    %v167 = vld [vmem:[#allocation2 + $0x214] sm:$0xf]
    %v168 = vld [vmem:[#allocation2 + $0x218] sm:$0xf]
    %v169 = vld [vmem:[#allocation2 + $0x21c] sm:$0xf]
    %v170 = vld [vmem:[#allocation2 + $0x220] sm:$0xf]
    %v171 = vld [vmem:[#allocation2 + $0x224] sm:$0xf]
    %v172 = vld [vmem:[#allocation2 + $0x228] sm:$0xf]
    %v173 = vld [vmem:[#allocation2 + $0x22c] sm:$0xf]
    %v174 = vld [vmem:[#allocation2 + $0x230] sm:$0xf]
    %v175 = vld [vmem:[#allocation2 + $0x234] sm:$0xf]
    %v176 = vld [vmem:[#allocation2 + $0x238] sm:$0xf]
    %v177 = vld [vmem:[#allocation2 + $0x23c] sm:$0xf]
    %v178 = vld [vmem:[#allocation2 + $0x240] sm:$0xf]
    %v179 = vld [vmem:[#allocation2 + $0x244] sm:$0xf]
    %v180 = vld [vmem:[#allocation2 + $0x248] sm:$0xf]
    %v181 = vld [vmem:[#allocation2 + $0x24c] sm:$0xf]
    %v182 = vld [vmem:[#allocation2 + $0x250] sm:$0xf]
    %v183 = vld [vmem:[#allocation2 + $0x254] sm:$0xf]
    %v184 = vld [vmem:[#allocation2 + $0x258] sm:$0xf]
    %v185 = vld [vmem:[#allocation2 + $0x25c] sm:$0xf]
    %v186 = vld [vmem:[#allocation2 + $0x260] sm:$0xf]
    %v187 = vld [vmem:[#allocation2 + $0x264] sm:$0xf]
    %v188 = vld [vmem:[#allocation2 + $0x268] sm:$0xf]
    %v189 = vld [vmem:[#allocation2 + $0x26c] sm:$0xf]
    %v190 = vld [vmem:[#allocation2 + $0x270] sm:$0xf]
    %v191 = vld [vmem:[#allocation2 + $0x274] sm:$0xf]
    %v192 = vld [vmem:[#allocation2 + $0x278] sm:$0xf]
    %v193 = vld [vmem:[#allocation2 + $0x27c] sm:$0xf]
    %v194 = vld [vmem:[#allocation2 + $0x280] sm:$0xf]
    %v195 = vld [vmem:[#allocation2 + $0x284] sm:$0xf]
    %v196 = vld [vmem:[#allocation2 + $0x288] sm:$0xf]
    %v197 = vld [vmem:[#allocation2 + $0x28c] sm:$0xf]
    %v198 = vld [vmem:[#allocation2 + $0x290] sm:$0xf]
    %v199 = vld [vmem:[#allocation2 + $0x294] sm:$0xf]
    %v200 = vld [vmem:[#allocation2 + $0x298] sm:$0xf]
    %v201 = vld [vmem:[#allocation2 + $0x29c] sm:$0xf]
    %v202 = vld [vmem:[#allocation2 + $0x2a0] sm:$0xf]
    %v203 = vld [vmem:[#allocation2 + $0x2a4] sm:$0xf]
    %v204 = vld [vmem:[#allocation2 + $0x2a8] sm:$0xf]
    %v205 = vld [vmem:[#allocation2 + $0x2ac] sm:$0xf]
    %v206 = vld [vmem:[#allocation2 + $0x2b0] sm:$0xf]
    %v207 = vld [vmem:[#allocation2 + $0x2b4] sm:$0xf]
    %v208 = vld [vmem:[#allocation2 + $0x2b8] sm:$0xf]
    %v209 = vld [vmem:[#allocation2 + $0x2bc] sm:$0xf]
    %v210 = vld [vmem:[#allocation2 + $0x2c0] sm:$0xf]
    %v211 = vld [vmem:[#allocation2 + $0x2c4] sm:$0xf]
    %v212 = vld [vmem:[#allocation2 + $0x2c8] sm:$0xf]
    %v213 = vld [vmem:[#allocation2 + $0x2cc] sm:$0xf]
    %v214 = vld [vmem:[#allocation2 + $0x2d0] sm:$0xf]
    %v215 = vld [vmem:[#allocation2 + $0x2d4] sm:$0xf]
    %v216 = vld [vmem:[#allocation2 + $0x2d8] sm:$0xf]
    %v217 = vld [vmem:[#allocation2 + $0x2dc] sm:$0xf]
    %v218 = vld [vmem:[#allocation2 + $0x2e0] sm:$0xf]
    %v219 = vld [vmem:[#allocation2 + $0x2e4] sm:$0xf]
    %v220 = vld [vmem:[#allocation2 + $0x2e8] sm:$0xf]
    %v221 = vld [vmem:[#allocation2 + $0x2ec] sm:$0xf]
    %v222 = vld [vmem:[#allocation2 + $0x2f0] sm:$0xf]
    %v223 = vld [vmem:[#allocation2 + $0x2f4] sm:$0xf]
    %v224 = vld [vmem:[#allocation2 + $0x2f8] sm:$0xf]
    %v225 = vld [vmem:[#allocation2 + $0x2fc] sm:$0xf]
    %v226 = vld [vmem:[#allocation2 + $0x300] sm:$0xf]
    %v227 = vld [vmem:[#allocation2 + $0x304] sm:$0xf]
    %v228 = vld [vmem:[#allocation2 + $0x308] sm:$0xf]
    %v229 = vld [vmem:[#allocation2 + $0x30c] sm:$0xf]
    %v230 = vld [vmem:[#allocation2 + $0x310] sm:$0xf]
    %v231 = vld [vmem:[#allocation2 + $0x314] sm:$0xf]
    %v232 = vld [vmem:[#allocation2 + $0x318] sm:$0xf]
    %v233 = vld [vmem:[#allocation2 + $0x31c] sm:$0xf]
    %v234 = vld [vmem:[#allocation2 + $0x320] sm:$0xf]
    %v235 = vld [vmem:[#allocation2 + $0x324] sm:$0xf]
    %v236 = vld [vmem:[#allocation2 + $0x328] sm:$0xf]
    %v237 = vld [vmem:[#allocation2 + $0x32c] sm:$0xf]
    %v238 = vld [vmem:[#allocation2 + $0x330] sm:$0xf]
    %v239 = vld [vmem:[#allocation2 + $0x334] sm:$0xf]
    %v240 = vld [vmem:[#allocation2 + $0x338] sm:$0xf]
    %v241 = vld [vmem:[#allocation2 + $0x33c] sm:$0xf]
    %v242 = vld [vmem:[#allocation2 + $0x340] sm:$0xf]
    %v243 = vld [vmem:[#allocation2 + $0x344] sm:$0xf]
    %v244 = vld [vmem:[#allocation2 + $0x348] sm:$0xf]
    %v245 = vld [vmem:[#allocation2 + $0x34c] sm:$0xf]
    %v246 = vld [vmem:[#allocation2 + $0x350] sm:$0xf]
    %v247 = vld [vmem:[#allocation2 + $0x354] sm:$0xf]
    %v248 = vld [vmem:[#allocation2 + $0x358] sm:$0xf]
    %v249 = vld [vmem:[#allocation2 + $0x35c] sm:$0xf]
    %v250 = vld [vmem:[#allocation2 + $0x360] sm:$0xf]
    %v251 = vld [vmem:[#allocation2 + $0x364] sm:$0xf]
    %v252 = vld [vmem:[#allocation2 + $0x368] sm:$0xf]
    %v253 = vld [vmem:[#allocation2 + $0x36c] sm:$0xf]
    %v254 = vld [vmem:[#allocation2 + $0x370] sm:$0xf]
    %v255 = vld [vmem:[#allocation2 + $0x374] sm:$0xf]
    %v256 = vld [vmem:[#allocation2 + $0x378] sm:$0xf]
    %v257 = vld [vmem:[#allocation2 + $0x37c] sm:$0xf]
    %v258 = vld [vmem:[#allocation2 + $0x380] sm:$0xf]
    %v259 = vld [vmem:[#allocation2 + $0x384] sm:$0xf]
    %v260 = vld [vmem:[#allocation2 + $0x388] sm:$0xf]
    %v261 = vld [vmem:[#allocation2 + $0x38c] sm:$0xf]
    %v262 = vld [vmem:[#allocation2 + $0x390] sm:$0xf]
    %v263 = vld [vmem:[#allocation2 + $0x394] sm:$0xf]
    %v264 = vld [vmem:[#allocation2 + $0x398] sm:$0xf]
    %v265 = vld [vmem:[#allocation2 + $0x39c] sm:$0xf]
    %v266 = vld [vmem:[#allocation2 + $0x3a0] sm:$0xf]
    %v267 = vld [vmem:[#allocation2 + $0x3a4] sm:$0xf]
    %v268 = vld [vmem:[#allocation2 + $0x3a8] sm:$0xf]
    %v269 = vld [vmem:[#allocation2 + $0x3ac] sm:$0xf]
    %v270 = vld [vmem:[#allocation2 + $0x3b0] sm:$0xf]
    %v271 = vld [vmem:[#allocation2 + $0x3b4] sm:$0xf]
    %v272 = vld [vmem:[#allocation2 + $0x3b8] sm:$0xf]
    %v273 = vld [vmem:[#allocation2 + $0x3bc] sm:$0xf]
    %v274 = vld [vmem:[#allocation2 + $0x3c0] sm:$0xf]
    %v275 = vld [vmem:[#allocation2 + $0x3c4] sm:$0xf]
    %v276 = vld [vmem:[#allocation2 + $0x3c8] sm:$0xf]
    %v277 = vld [vmem:[#allocation2 + $0x3cc] sm:$0xf]
    %v278 = vld [vmem:[#allocation2 + $0x3d0] sm:$0xf]
    %v279 = vld [vmem:[#allocation2 + $0x3d4] sm:$0xf]
    %v280 = vld [vmem:[#allocation2 + $0x3d8] sm:$0xf]
    %v281 = vld [vmem:[#allocation2 + $0x3dc] sm:$0xf]
    %v282 = vld [vmem:[#allocation2 + $0x3e0] sm:$0xf]
    %v283 = vld [vmem:[#allocation2 + $0x3e4] sm:$0xf]
    %v284 = vld [vmem:[#allocation2 + $0x3e8] sm:$0xf]
    %v285 = vld [vmem:[#allocation2 + $0x3ec] sm:$0xf]
    %v286 = vld [vmem:[#allocation2 + $0x3f0] sm:$0xf]
    %v287 = vld [vmem:[#allocation2 + $0x3f4] sm:$0xf]
    %v288 = vld [vmem:[#allocation2 + $0x3f8] sm:$0xf]
    %v289 = vld [vmem:[#allocation2 + $0x3fc] sm:$0xf]
    %v290 = vld [vmem:[#allocation2 + $0x400] sm:$0xf]
    %v291 = vld [vmem:[#allocation2 + $0x404] sm:$0xf]
    %v292 = vld [vmem:[#allocation2 + $0x408] sm:$0xf]
    %v293 = vld [vmem:[#allocation2 + $0x40c] sm:$0xf]
    %v294 = vld [vmem:[#allocation2 + $0x410] sm:$0xf]
    %v295 = vld [vmem:[#allocation2 + $0x414] sm:$0xf]
    %v296 = vld [vmem:[#allocation2 + $0x418] sm:$0xf]
    %v297 = vld [vmem:[#allocation2 + $0x41c] sm:$0xf]
    %v298 = vld [vmem:[#allocation2 + $0x420] sm:$0xf]
    %v299 = vld [vmem:[#allocation2 + $0x424] sm:$0xf]
    %v300 = vld [vmem:[#allocation2 + $0x428] sm:$0xf]
    %v301 = vld [vmem:[#allocation2 + $0x42c] sm:$0xf]
    %v302 = vld [vmem:[#allocation2 + $0x430] sm:$0xf]
    %v303 = vld [vmem:[#allocation2 + $0x434] sm:$0xf]
    %v304 = vld [vmem:[#allocation2 + $0x438] sm:$0xf]
    %v305 = vld [vmem:[#allocation2 + $0x43c] sm:$0xf]
    %v306 = vld [vmem:[#allocation2 + $0x440] sm:$0xf]
    %v307 = vld [vmem:[#allocation2 + $0x444] sm:$0xf]
    %v308 = vld [vmem:[#allocation2 + $0x448] sm:$0xf]
    %v309 = vld [vmem:[#allocation2 + $0x44c] sm:$0xf]
    %v310 = vld [vmem:[#allocation2 + $0x450] sm:$0xf]
    %v311 = vld [vmem:[#allocation2 + $0x454] sm:$0xf]
    %v312 = vld [vmem:[#allocation2 + $0x458] sm:$0xf]
    %v313 = vld [vmem:[#allocation2 + $0x45c] sm:$0xf]
    %v314 = vld [vmem:[#allocation2 + $0x460] sm:$0xf]
    %v315 = vld [vmem:[#allocation2 + $0x464] sm:$0xf]
    %v316 = vld [vmem:[#allocation2 + $0x468] sm:$0xf]
    %v317 = vld [vmem:[#allocation2 + $0x46c] sm:$0xf]
    %v318 = vld [vmem:[#allocation2 + $0x470] sm:$0xf]
    %v319 = vld [vmem:[#allocation2 + $0x474] sm:$0xf]
    %v320 = vld [vmem:[#allocation2 + $0x478] sm:$0xf]
    %v321 = vld [vmem:[#allocation2 + $0x47c] sm:$0xf]
    %v322 = vld [vmem:[#allocation2 + $0x480] sm:$0xf]
    %v323 = vld [vmem:[#allocation2 + $0x484] sm:$0xf]
    %v324 = vld [vmem:[#allocation2 + $0x488] sm:$0xf]
    %v325 = vld [vmem:[#allocation2 + $0x48c] sm:$0xf]
    %v326 = vld [vmem:[#allocation2 + $0x490] sm:$0xf]
    %v327 = vld [vmem:[#allocation2 + $0x494] sm:$0xf]
    %v328 = vld [vmem:[#allocation2 + $0x498] sm:$0xf]
    %v329 = vld [vmem:[#allocation2 + $0x49c] sm:$0xf]
    %v330 = vld [vmem:[#allocation2 + $0x4a0] sm:$0xf]
    %v331 = vld [vmem:[#allocation2 + $0x4a4] sm:$0xf]
    %v332 = vld [vmem:[#allocation2 + $0x4a8] sm:$0xf]
    %v333 = vld [vmem:[#allocation2 + $0x4ac] sm:$0xf]
    %v334 = vld [vmem:[#allocation2 + $0x4b0] sm:$0xf]
    %v335 = vld [vmem:[#allocation2 + $0x4b4] sm:$0xf]
    %v336 = vld [vmem:[#allocation2 + $0x4b8] sm:$0xf]
    %v337 = vld [vmem:[#allocation2 + $0x4bc] sm:$0xf]
    %v338 = vld [vmem:[#allocation2 + $0x4c0] sm:$0xf]
    %v339 = vld [vmem:[#allocation2 + $0x4c4] sm:$0xf]
    %v340 = vld [vmem:[#allocation2 + $0x4c8] sm:$0xf]
    %v341 = vld [vmem:[#allocation2 + $0x4cc] sm:$0xf]
    %v342 = vld [vmem:[#allocation2 + $0x4d0] sm:$0xf]
    %v343 = vld [vmem:[#allocation2 + $0x4d4] sm:$0xf]
    %v344 = vld [vmem:[#allocation2 + $0x4d8] sm:$0xf]
    %v345 = vld [vmem:[#allocation2 + $0x4dc] sm:$0xf]
    %v346 = vld [vmem:[#allocation2 + $0x4e0] sm:$0xf]
    %v347 = vld [vmem:[#allocation2 + $0x4e4] sm:$0xf]
    %v348 = vld [vmem:[#allocation2 + $0x4e8] sm:$0xf]
    %v349 = vld [vmem:[#allocation2 + $0x4ec] sm:$0xf]
    %v350 = vld [vmem:[#allocation2 + $0x4f0] sm:$0xf]
    %v351 = vld [vmem:[#allocation2 + $0x4f4] sm:$0xf]
    %v352 = vld [vmem:[#allocation2 + $0x4f8] sm:$0xf]
    %v353 = vld [vmem:[#allocation2 + $0x4fc] sm:$0xf]
    %v354 = vld [vmem:[#allocation2 + $0x500] sm:$0xf]
    %v355 = vld [vmem:[#allocation2 + $0x504] sm:$0xf]
    %v356 = vld [vmem:[#allocation2 + $0x508] sm:$0xf]
    %v357 = vld [vmem:[#allocation2 + $0x50c] sm:$0xf]
    %v358 = vld [vmem:[#allocation2 + $0x510] sm:$0xf]
    %v359 = vld [vmem:[#allocation2 + $0x514] sm:$0xf]
    %v360 = vld [vmem:[#allocation2 + $0x518] sm:$0xf]
    %v361 = vld [vmem:[#allocation2 + $0x51c] sm:$0xf]
    %v362 = vld [vmem:[#allocation2 + $0x520] sm:$0xf]
    %v363 = vld [vmem:[#allocation2 + $0x524] sm:$0xf]
    %v364 = vld [vmem:[#allocation2 + $0x528] sm:$0xf]
    %v365 = vld [vmem:[#allocation2 + $0x52c] sm:$0xf]
    %v366 = vld [vmem:[#allocation2 + $0x530] sm:$0xf]
    %v367 = vld [vmem:[#allocation2 + $0x534] sm:$0xf]
    %v368 = vld [vmem:[#allocation2 + $0x538] sm:$0xf]
    %v369 = vld [vmem:[#allocation2 + $0x53c] sm:$0xf]
    %v370 = vld [vmem:[#allocation2 + $0x540] sm:$0xf]
    %v371 = vld [vmem:[#allocation2 + $0x544] sm:$0xf]
    %v372 = vld [vmem:[#allocation2 + $0x548] sm:$0xf]
    %v373 = vld [vmem:[#allocation2 + $0x54c] sm:$0xf]
    %v374 = vld [vmem:[#allocation2 + $0x550] sm:$0xf]
    %v375 = vld [vmem:[#allocation2 + $0x554] sm:$0xf]
    %v376 = vld [vmem:[#allocation2 + $0x558] sm:$0xf]
    %v377 = vld [vmem:[#allocation2 + $0x55c] sm:$0xf]
    %v378 = vld [vmem:[#allocation2 + $0x560] sm:$0xf]
    %v379 = vld [vmem:[#allocation2 + $0x564] sm:$0xf]
    %v380 = vld [vmem:[#allocation2 + $0x568] sm:$0xf]
    %v381 = vld [vmem:[#allocation2 + $0x56c] sm:$0xf]
    %v382 = vld [vmem:[#allocation2 + $0x570] sm:$0xf]
    %v383 = vld [vmem:[#allocation2 + $0x574] sm:$0xf]
    %v384 = vld [vmem:[#allocation2 + $0x578] sm:$0xf]
    %v385 = vld [vmem:[#allocation2 + $0x57c] sm:$0xf]
    %v386 = vld [vmem:[#allocation2 + $0x580] sm:$0xf]
    %v387 = vld [vmem:[#allocation2 + $0x584] sm:$0xf]
    %v388 = vld [vmem:[#allocation2 + $0x588] sm:$0xf]
    %v389 = vld [vmem:[#allocation2 + $0x58c] sm:$0xf]
    %v390 = vld [vmem:[#allocation2 + $0x590] sm:$0xf]
    %v391 = vld [vmem:[#allocation2 + $0x594] sm:$0xf]
    %v392 = vld [vmem:[#allocation2 + $0x598] sm:$0xf]
    %v393 = vld [vmem:[#allocation2 + $0x59c] sm:$0xf]
    %v394 = vld [vmem:[#allocation2 + $0x5a0] sm:$0xf]
    %v395 = vld [vmem:[#allocation2 + $0x5a4] sm:$0xf]
    %v396 = vld [vmem:[#allocation2 + $0x5a8] sm:$0xf]
    %v397 = vld [vmem:[#allocation2 + $0x5ac] sm:$0xf]
    %v398 = vld [vmem:[#allocation2 + $0x5b0] sm:$0xf]
    %v399 = vld [vmem:[#allocation2 + $0x5b4] sm:$0xf]
    %v400 = vld [vmem:[#allocation2 + $0x5b8] sm:$0xf]
    %v401 = vld [vmem:[#allocation2 + $0x5bc] sm:$0xf]
    %v402 = vld [vmem:[#allocation2 + $0x5c0] sm:$0xf]
    %v403 = vld [vmem:[#allocation2 + $0x5c4] sm:$0xf]
    %v404 = vld [vmem:[#allocation2 + $0x5c8] sm:$0xf]
    %v405 = vld [vmem:[#allocation2 + $0x5cc] sm:$0xf]
    %v406 = vld [vmem:[#allocation2 + $0x5d0] sm:$0xf]
    %v407 = vld [vmem:[#allocation2 + $0x5d4] sm:$0xf]
    %v408 = vld [vmem:[#allocation2 + $0x5d8] sm:$0xf]
    %v409 = vld [vmem:[#allocation2 + $0x5dc] sm:$0xf]
    %v410 = vld [vmem:[#allocation2 + $0x5e0] sm:$0xf]
    %v411 = vld [vmem:[#allocation2 + $0x5e4] sm:$0xf]
    %v412 = vld [vmem:[#allocation2 + $0x5e8] sm:$0xf]
    %v413 = vld [vmem:[#allocation2 + $0x5ec] sm:$0xf]
    %v414 = vld [vmem:[#allocation2 + $0x5f0] sm:$0xf]
    %v415 = vld [vmem:[#allocation2 + $0x5f4] sm:$0xf]
    %v416 = vld [vmem:[#allocation2 + $0x5f8] sm:$0xf]
    %v417 = vld [vmem:[#allocation2 + $0x5fc] sm:$0xf]
    %v418 = vld [vmem:[#allocation2 + $0x600] sm:$0xf]
    %v419 = vld [vmem:[#allocation2 + $0x604] sm:$0xf]
    %v420 = vld [vmem:[#allocation2 + $0x608] sm:$0xf]
    %v421 = vld [vmem:[#allocation2 + $0x60c] sm:$0xf]
    %v422 = vld [vmem:[#allocation2 + $0x610] sm:$0xf]
    %v423 = vld [vmem:[#allocation2 + $0x614] sm:$0xf]
    %v424 = vld [vmem:[#allocation2 + $0x618] sm:$0xf]
    %v425 = vld [vmem:[#allocation2 + $0x61c] sm:$0xf]
    %v426 = vld [vmem:[#allocation2 + $0x620] sm:$0xf]
    %v427 = vld [vmem:[#allocation2 + $0x624] sm:$0xf]
    %v428 = vld [vmem:[#allocation2 + $0x628] sm:$0xf]
    %v429 = vld [vmem:[#allocation2 + $0x62c] sm:$0xf]
    %v430 = vld [vmem:[#allocation2 + $0x630] sm:$0xf]
    %v431 = vld [vmem:[#allocation2 + $0x634] sm:$0xf]
    %v432 = vld [vmem:[#allocation2 + $0x638] sm:$0xf]
    %v433 = vld [vmem:[#allocation2 + $0x63c] sm:$0xf]
    %v434 = vld [vmem:[%s2] sm:$0x1]
    %v436 = vlaneseq
    %v437 = vshrl.u32 %v436, 7
    %v438 = vsub.s32 0, %v437
    %v439 = vrot.slane %v434, %v438
    %v445 = vcombine.high %v30, %v30
    %v447 = vunpack.c.l.s4 1966171168
    %v448 = vunpack.c.0.s8 %v447
    %v449 = vlaneseq
    %v450 = vshrl.u32 %v449, 7
    %v451 = vsub.s32 %v448, %v450
    %v452 = vrot.slane %v30, %v451
    %v454 = vunpack.c.l.s4 1966171168
    %v455 = vunpack.c.0.s8 %v454
    %v456 = vlaneseq
    %v457 = vshrl.u32 %v456, 7
    %v458 = vsub.s32 %v455, %v457
    %v459 = vrot.slane %v445, %v458
    %v460 = vcombine.high %v452, %v452
    %v461 = vcombine.high %v459, %v459
    %v463 = vunpack.c.l.s4 1966171168
    %v464 = vunpack.c.0.s8 %v463
    %v465 = vlaneseq
    %v466 = vshrl.u32 %v465, 7
    %v467 = vsub.s32 %v464, %v466
    %v468 = vrot.slane %v452, %v467
    %v470 = vunpack.c.l.s4 1966171168
    %v471 = vunpack.c.0.s8 %v470
    %v472 = vlaneseq
    %v473 = vshrl.u32 %v472, 7
    %v474 = vsub.s32 %v471, %v473
    %v475 = vrot.slane %v459, %v474
    %v477 = vunpack.c.l.s4 1966171168
    %v478 = vunpack.c.0.s8 %v477
    %v479 = vlaneseq
    %v480 = vshrl.u32 %v479, 7
    %v481 = vsub.s32 %v478, %v480
    %v482 = vrot.slane %v460, %v481
    %v484 = vunpack.c.l.s4 1966171168
    %v485 = vunpack.c.0.s8 %v484
    %v486 = vlaneseq
    %v487 = vshrl.u32 %v486, 7
    %v488 = vsub.s32 %v485, %v487
    %v489 = vrot.slane %v461, %v488
    %v490 = vcombine.high %v468, %v468
    %v491 = vcombine.high %v475, %v475
    %v492 = vcombine.high %v482, %v482
    %v493 = vcombine.high %v489, %v489
    %v494 = vcombine.high %v31, %v31
    %v496 = vunpack.c.l.s4 1966171168
    %v497 = vunpack.c.0.s8 %v496
    %v498 = vlaneseq
    %v499 = vshrl.u32 %v498, 7
    %v500 = vsub.s32 %v497, %v499
    %v501 = vrot.slane %v31, %v500
    %v503 = vunpack.c.l.s4 1966171168
    %v504 = vunpack.c.0.s8 %v503
    %v505 = vlaneseq
    %v506 = vshrl.u32 %v505, 7
    %v507 = vsub.s32 %v504, %v506
    %v508 = vrot.slane %v494, %v507
    %v509 = vcombine.high %v501, %v501
    %v510 = vcombine.high %v508, %v508
    %v512 = vunpack.c.l.s4 1966171168
    %v513 = vunpack.c.0.s8 %v512
    %v514 = vlaneseq
    %v515 = vshrl.u32 %v514, 7
    %v516 = vsub.s32 %v513, %v515
    %v517 = vrot.slane %v501, %v516
    %v519 = vunpack.c.l.s4 1966171168
    %v520 = vunpack.c.0.s8 %v519
    %v521 = vlaneseq
    %v522 = vshrl.u32 %v521, 7
    %v523 = vsub.s32 %v520, %v522
    %v524 = vrot.slane %v508, %v523
    %v526 = vunpack.c.l.s4 1966171168
    %v527 = vunpack.c.0.s8 %v526
    %v528 = vlaneseq
    %v529 = vshrl.u32 %v528, 7
    %v530 = vsub.s32 %v527, %v529
    %v531 = vrot.slane %v509, %v530
    %v533 = vunpack.c.l.s4 1966171168
    %v534 = vunpack.c.0.s8 %v533
    %v535 = vlaneseq
    %v536 = vshrl.u32 %v535, 7
    %v537 = vsub.s32 %v534, %v536
    %v538 = vrot.slane %v510, %v537
    %v539 = vcombine.high %v517, %v517
    %v540 = vcombine.high %v524, %v524
    %v541 = vcombine.high %v531, %v531
    %v542 = vcombine.high %v538, %v538
    %v543 = vcombine.high %v32, %v32
    %v545 = vunpack.c.l.s4 1966171168
    %v546 = vunpack.c.0.s8 %v545
    %v547 = vlaneseq
    %v548 = vshrl.u32 %v547, 7
    %v549 = vsub.s32 %v546, %v548
    %v550 = vrot.slane %v32, %v549
    %v552 = vunpack.c.l.s4 1966171168
    %v553 = vunpack.c.0.s8 %v552
    %v554 = vlaneseq
    %v555 = vshrl.u32 %v554, 7
    %v556 = vsub.s32 %v553, %v555
    %v557 = vrot.slane %v543, %v556
    %v558 = vcombine.high %v550, %v550
    %v559 = vcombine.high %v557, %v557
    %v561 = vunpack.c.l.s4 1966171168
    %v562 = vunpack.c.0.s8 %v561
    %v563 = vlaneseq
    %v564 = vshrl.u32 %v563, 7
    %v565 = vsub.s32 %v562, %v564
    %v566 = vrot.slane %v550, %v565
    %v568 = vunpack.c.l.s4 1966171168
    %v569 = vunpack.c.0.s8 %v568
    %v570 = vlaneseq
    %v571 = vshrl.u32 %v570, 7
    %v572 = vsub.s32 %v569, %v571
    %v573 = vrot.slane %v557, %v572
    %v575 = vunpack.c.l.s4 1966171168
    %v576 = vunpack.c.0.s8 %v575
    %v577 = vlaneseq
    %v578 = vshrl.u32 %v577, 7
    %v579 = vsub.s32 %v576, %v578
    %v580 = vrot.slane %v558, %v579
    %v582 = vunpack.c.l.s4 1966171168
    %v583 = vunpack.c.0.s8 %v582
    %v584 = vlaneseq
    %v585 = vshrl.u32 %v584, 7
    %v586 = vsub.s32 %v583, %v585
    %v587 = vrot.slane %v559, %v586
    %v588 = vcombine.high %v566, %v566
    %v589 = vcombine.high %v573, %v573
    %v590 = vcombine.high %v580, %v580
    %v591 = vcombine.high %v587, %v587
    %v593 = vunpack.c.l.s4 1966171168
    %v594 = vunpack.c.0.s8 %v593
    %v595 = vlaneseq
    %v596 = vshrl.u32 %v595, 7
    %v597 = vsub.s32 %v594, %v596
    %v598 = vrot.slane %v33, %v597
    %v600 = vunpack.c.l.s4 1966171168
    %v601 = vunpack.c.0.s8 %v600
    %v602 = vlaneseq
    %v603 = vshrl.u32 %v602, 7
    %v604 = vsub.s32 %v601, %v603
    %v605 = vrot.slane %v598, %v604
    %v1031 = vunpack.c.l.b16 %v34
    %v1032 = vunpack.c.l.b16 %v35
    %v1033 = vunpack.c.l.b16 %v36
    %v1034 = vunpack.c.l.b16 %v37
    %v1035 = vunpack.c.l.b16 %v38
    %v1036 = vunpack.c.l.b16 %v39
    %v1037 = vunpack.c.l.b16 %v40
    %v1038 = vunpack.c.l.b16 %v41
    %v1039 = vunpack.c.l.b16 %v42
    %v1040 = vunpack.c.l.b16 %v43
    %v1041 = vunpack.c.l.b16 %v44
    %v1042 = vunpack.c.l.b16 %v45
    %v1043 = vunpack.c.l.b16 %v46
    %v1044 = vunpack.c.l.b16 %v47
    %v1045 = vunpack.c.l.b16 %v48
    %v1046 = vunpack.c.l.b16 %v49
    %v1047 = vunpack.c.l.b16 %v50
    %v1048 = vunpack.c.l.b16 %v51
    %v1049 = vunpack.c.l.b16 %v52
    %v1050 = vunpack.c.l.b16 %v53
    %v1051 = vunpack.c.l.b16 %v54
    %v1052 = vunpack.c.l.b16 %v55
    %v1053 = vunpack.c.l.b16 %v56
    %v1054 = vunpack.c.l.b16 %v57
    %v1055 = vunpack.c.l.b16 %v58
    %v1056 = vunpack.c.l.b16 %v59
    %v1057 = vunpack.c.l.b16 %v60
    %v1058 = vunpack.c.l.b16 %v61
    %v1059 = vunpack.c.l.b16 %v62
    %v1060 = vunpack.c.l.b16 %v63
    %v1061 = vunpack.c.l.b16 %v64
    %v1062 = vunpack.c.l.b16 %v65
    %v1063 = vunpack.c.l.b16 %v66
    %v1064 = vunpack.c.l.b16 %v67
    %v1065 = vunpack.c.l.b16 %v68
    %v1066 = vunpack.c.l.b16 %v69
    %v1067 = vunpack.c.l.b16 %v70
    %v1068 = vunpack.c.l.b16 %v71
    %v1069 = vunpack.c.l.b16 %v72
    %v1070 = vunpack.c.l.b16 %v73
    %v1071 = vunpack.c.l.b16 %v74
    %v1072 = vunpack.c.l.b16 %v75
    %v1073 = vunpack.c.l.b16 %v76
    %v1074 = vunpack.c.l.b16 %v77
    %v1075 = vunpack.c.l.b16 %v78
    %v1076 = vunpack.c.l.b16 %v79
    %v1077 = vunpack.c.l.b16 %v80
    %v1078 = vunpack.c.l.b16 %v81
    %v1079 = vunpack.c.l.b16 %v82
    %v1080 = vunpack.c.l.b16 %v83
    %v1081 = vunpack.c.l.b16 %v84
    %v1082 = vunpack.c.l.b16 %v85
    %v1083 = vunpack.c.l.b16 %v86
    %v1084 = vunpack.c.l.b16 %v87
    %v1085 = vunpack.c.l.b16 %v88
    %v1086 = vunpack.c.l.b16 %v89
    %v1087 = vunpack.c.l.b16 %v90
    %v1088 = vunpack.c.l.b16 %v91
    %v1089 = vunpack.c.l.b16 %v92
    %v1090 = vunpack.c.l.b16 %v93
    %v1091 = vunpack.c.l.b16 %v94
    %v1092 = vunpack.c.l.b16 %v95
    %v1093 = vunpack.c.l.b16 %v96
    %v1094 = vunpack.c.l.b16 %v97
    %v1095 = vunpack.c.l.b16 %v98
    %v1096 = vunpack.c.l.b16 %v99
    %v1097 = vunpack.c.l.b16 %v100
    %v1098 = vunpack.c.l.b16 %v101
    %v1099 = vunpack.c.l.b16 %v102
    %v1100 = vunpack.c.l.b16 %v103
    %v1101 = vunpack.c.l.b16 %v104
    %v1102 = vunpack.c.l.b16 %v105
    %v1103 = vunpack.c.l.b16 %v106
    %v1104 = vunpack.c.l.b16 %v107
    %v1105 = vunpack.c.l.b16 %v108
    %v1106 = vunpack.c.l.b16 %v109
    %v1107 = vunpack.c.l.b16 %v110
    %v1108 = vunpack.c.l.b16 %v111
    %v1109 = vunpack.c.l.b16 %v112
    %v1110 = vunpack.c.l.b16 %v113
    %v1111 = vunpack.c.l.b16 %v114
    %v1112 = vunpack.c.l.b16 %v115
    %v1113 = vunpack.c.l.b16 %v116
    %v1114 = vunpack.c.l.b16 %v117
    %v1115 = vunpack.c.l.b16 %v118
    %v1116 = vunpack.c.l.b16 %v119
    %v1117 = vunpack.c.l.b16 %v120
    %v1118 = vunpack.c.l.b16 %v121
    %v1119 = vunpack.c.l.b16 %v122
    %v1120 = vunpack.c.l.b16 %v123
    %v1121 = vunpack.c.l.b16 %v124
    %v1122 = vunpack.c.l.b16 %v125
    %v1123 = vunpack.c.l.b16 %v126
    %v1124 = vunpack.c.l.b16 %v127
    %v1125 = vunpack.c.l.b16 %v128
    %v1126 = vunpack.c.l.b16 %v129
    %v1127 = vunpack.c.l.b16 %v130
    %v1128 = vunpack.c.l.b16 %v131
    %v1129 = vunpack.c.l.b16 %v132
    %v1130 = vunpack.c.l.b16 %v133
    %v1131 = vunpack.c.l.b16 %v134
    %v1132 = vunpack.c.l.b16 %v135
    %v1133 = vunpack.c.l.b16 %v136
    %v1134 = vunpack.c.l.b16 %v137
    %v1135 = vunpack.c.l.b16 %v138
    %v1136 = vunpack.c.l.b16 %v139
    %v1137 = vunpack.c.l.b16 %v140
    %v1138 = vunpack.c.l.b16 %v141
    %v1139 = vunpack.c.l.b16 %v142
    %v1140 = vunpack.c.l.b16 %v143
    %v1141 = vunpack.c.l.b16 %v144
    %v1142 = vunpack.c.l.b16 %v145
    %v1143 = vunpack.c.l.b16 %v146
    %v1144 = vunpack.c.l.b16 %v147
    %v1145 = vunpack.c.l.b16 %v148
    %v1146 = vunpack.c.l.b16 %v149
    %v1147 = vunpack.c.l.b16 %v150
    %v1148 = vunpack.c.l.b16 %v151
    %v1149 = vunpack.c.l.b16 %v152
    %v1150 = vunpack.c.l.b16 %v153
    %v1151 = vunpack.c.l.b16 %v154
    %v1152 = vunpack.c.l.b16 %v155
    %v1153 = vunpack.c.l.b16 %v156
    %v1154 = vunpack.c.l.b16 %v157
    %v1155 = vunpack.c.l.b16 %v158
    %v1156 = vunpack.c.l.b16 %v159
    %v1157 = vunpack.c.l.b16 %v160
    %v1158 = vunpack.c.l.b16 %v161
    %v1159 = vunpack.c.l.b16 %v162
    %v1160 = vunpack.c.l.b16 %v163
    %v1161 = vunpack.c.l.b16 %v164
    %v1162 = vunpack.c.l.b16 %v165
    %v1163 = vunpack.c.l.b16 %v166
    %v1164 = vunpack.c.l.b16 %v167
    %v1165 = vunpack.c.l.b16 %v168
    %v1166 = vunpack.c.l.b16 %v169
    %v1167 = vunpack.c.l.b16 %v170
    %v1168 = vunpack.c.l.b16 %v171
    %v1169 = vunpack.c.l.b16 %v172
    %v1170 = vunpack.c.l.b16 %v173
    %v1171 = vunpack.c.l.b16 %v174
    %v1172 = vunpack.c.l.b16 %v175
    %v1173 = vunpack.c.l.b16 %v176
    %v1174 = vunpack.c.l.b16 %v177
    %v1175 = vunpack.c.l.b16 %v178
    %v1176 = vunpack.c.l.b16 %v179
    %v1177 = vunpack.c.l.b16 %v180
    %v1178 = vunpack.c.l.b16 %v181
    %v1179 = vunpack.c.l.b16 %v182
    %v1180 = vunpack.c.l.b16 %v183
    %v1181 = vunpack.c.l.b16 %v184
    %v1182 = vunpack.c.l.b16 %v185
    %v1183 = vunpack.c.l.b16 %v186
    %v1184 = vunpack.c.l.b16 %v187
    %v1185 = vunpack.c.l.b16 %v188
    %v1186 = vunpack.c.l.b16 %v189
    %v1187 = vunpack.c.l.b16 %v190
    %v1188 = vunpack.c.l.b16 %v191
    %v1189 = vunpack.c.l.b16 %v192
    %v1190 = vunpack.c.l.b16 %v193
    %v1191 = vunpack.c.l.b16 %v194
    %v1192 = vunpack.c.l.b16 %v195
    %v1193 = vunpack.c.l.b16 %v196
    %v1194 = vunpack.c.l.b16 %v197
    %v1195 = vunpack.c.l.b16 %v198
    %v1196 = vunpack.c.l.b16 %v199
    %v1197 = vunpack.c.l.b16 %v200
    %v1198 = vunpack.c.l.b16 %v201
    %v1199 = vunpack.c.l.b16 %v202
    %v1200 = vunpack.c.l.b16 %v203
    %v1201 = vunpack.c.l.b16 %v204
    %v1202 = vunpack.c.l.b16 %v205
    %v1203 = vunpack.c.l.b16 %v206
    %v1204 = vunpack.c.l.b16 %v207
    %v1205 = vunpack.c.l.b16 %v208
    %v1206 = vunpack.c.l.b16 %v209
    %v1207 = vunpack.c.l.b16 %v210
    %v1208 = vunpack.c.l.b16 %v211
    %v1209 = vunpack.c.l.b16 %v212
    %v1210 = vunpack.c.l.b16 %v213
    %v1211 = vunpack.c.l.b16 %v214
    %v1212 = vunpack.c.l.b16 %v215
    %v1213 = vunpack.c.l.b16 %v216
    %v1214 = vunpack.c.l.b16 %v217
    %v1215 = vunpack.c.l.b16 %v218
    %v1216 = vunpack.c.l.b16 %v219
    %v1217 = vunpack.c.l.b16 %v220
    %v1218 = vunpack.c.l.b16 %v221
    %v1219 = vunpack.c.l.b16 %v222
    %v1220 = vunpack.c.l.b16 %v223
    %v1221 = vunpack.c.l.b16 %v224
    %v1222 = vunpack.c.l.b16 %v225
    %v1223 = vunpack.c.l.b16 %v226
    %v1224 = vunpack.c.l.b16 %v227
    %v1225 = vunpack.c.l.b16 %v228
    %v1226 = vunpack.c.l.b16 %v229
    %v1227 = vunpack.c.l.b16 %v230
    %v1228 = vunpack.c.l.b16 %v231
    %v1229 = vunpack.c.l.b16 %v232
    %v1230 = vunpack.c.l.b16 %v233
    %v1231 = vunpack.c.l.b16 %v234
    %v1232 = vunpack.c.l.b16 %v235
    %v1233 = vunpack.c.l.b16 %v236
    %v1234 = vunpack.c.l.b16 %v237
    %v1235 = vunpack.c.l.b16 %v238
    %v1236 = vunpack.c.l.b16 %v239
    %v1237 = vunpack.c.l.b16 %v240
    %v1238 = vunpack.c.l.b16 %v241
    %v1239 = vunpack.c.l.b16 %v242
    %v1240 = vunpack.c.l.b16 %v243
    %v1241 = vunpack.c.l.b16 %v244
    %v1242 = vunpack.c.l.b16 %v245
    %v1243 = vunpack.c.l.b16 %v246
    %v1244 = vunpack.c.l.b16 %v247
    %v1245 = vunpack.c.l.b16 %v248
    %v1246 = vunpack.c.l.b16 %v249
    %v1247 = vunpack.c.l.b16 %v250
    %v1248 = vunpack.c.l.b16 %v251
    %v1249 = vunpack.c.l.b16 %v252
    %v1250 = vunpack.c.l.b16 %v253
    %v1251 = vunpack.c.l.b16 %v254
    %v1252 = vunpack.c.l.b16 %v255
    %v1253 = vunpack.c.l.b16 %v256
    %v1254 = vunpack.c.l.b16 %v257
    %v1255 = vunpack.c.l.b16 %v258
    %v1256 = vunpack.c.l.b16 %v259
    %v1257 = vunpack.c.l.b16 %v260
    %v1258 = vunpack.c.l.b16 %v261
    %v1259 = vunpack.c.l.b16 %v262
    %v1260 = vunpack.c.l.b16 %v263
    %v1261 = vunpack.c.l.b16 %v264
    %v1262 = vunpack.c.l.b16 %v265
    %v1263 = vunpack.c.l.b16 %v266
    %v1264 = vunpack.c.l.b16 %v267
    %v1265 = vunpack.c.l.b16 %v268
    %v1266 = vunpack.c.l.b16 %v269
    %v1267 = vunpack.c.l.b16 %v270
    %v1268 = vunpack.c.l.b16 %v271
    %v1269 = vunpack.c.l.b16 %v272
    %v1270 = vunpack.c.l.b16 %v273
    %v1271 = vunpack.c.l.b16 %v274
    %v1272 = vunpack.c.l.b16 %v275
    %v1273 = vunpack.c.l.b16 %v276
    %v1274 = vunpack.c.l.b16 %v277
    %v1275 = vunpack.c.l.b16 %v278
    %v1276 = vunpack.c.l.b16 %v279
    %v1277 = vunpack.c.l.b16 %v280
    %v1278 = vunpack.c.l.b16 %v281
    %v1279 = vunpack.c.l.b16 %v282
    %v1280 = vunpack.c.l.b16 %v283
    %v1281 = vunpack.c.l.b16 %v284
    %v1282 = vunpack.c.l.b16 %v285
    %v1283 = vunpack.c.l.b16 %v286
    %v1284 = vunpack.c.l.b16 %v287
    %v1285 = vunpack.c.l.b16 %v288
    %v1286 = vunpack.c.l.b16 %v289
    %v1287 = vunpack.c.l.b16 %v290
    %v1288 = vunpack.c.l.b16 %v291
    %v1289 = vunpack.c.l.b16 %v292
    %v1290 = vunpack.c.l.b16 %v293
    %v1291 = vunpack.c.l.b16 %v294
    %v1292 = vunpack.c.l.b16 %v295
    %v1293 = vunpack.c.l.b16 %v296
    %v1294 = vunpack.c.l.b16 %v297
    %v1295 = vunpack.c.l.b16 %v298
    %v1296 = vunpack.c.l.b16 %v299
    %v1297 = vunpack.c.l.b16 %v300
    %v1298 = vunpack.c.l.b16 %v301
    %v1299 = vunpack.c.l.b16 %v302
    %v1300 = vunpack.c.l.b16 %v303
    %v1301 = vunpack.c.l.b16 %v304
    %v1302 = vunpack.c.l.b16 %v305
    %v1303 = vunpack.c.l.b16 %v306
    %v1304 = vunpack.c.l.b16 %v307
    %v1305 = vunpack.c.l.b16 %v308
    %v1306 = vunpack.c.l.b16 %v309
    %v1307 = vunpack.c.l.b16 %v310
    %v1308 = vunpack.c.l.b16 %v311
    %v1309 = vunpack.c.l.b16 %v312
    %v1310 = vunpack.c.l.b16 %v313
    %v1311 = vunpack.c.l.b16 %v314
    %v1312 = vunpack.c.l.b16 %v315
    %v1313 = vunpack.c.l.b16 %v316
    %v1314 = vunpack.c.l.b16 %v317
    %v1315 = vunpack.c.l.b16 %v318
    %v1316 = vunpack.c.l.b16 %v319
    %v1317 = vunpack.c.l.b16 %v320
    %v1318 = vunpack.c.l.b16 %v321
    %v1319 = vunpack.c.l.b16 %v322
    %v1320 = vunpack.c.l.b16 %v323
    %v1321 = vunpack.c.l.b16 %v324
    %v1322 = vunpack.c.l.b16 %v325
    %v1323 = vunpack.c.l.b16 %v326
    %v1324 = vunpack.c.l.b16 %v327
    %v1325 = vunpack.c.l.b16 %v328
    %v1326 = vunpack.c.l.b16 %v329
    %v1327 = vunpack.c.l.b16 %v330
    %v1328 = vunpack.c.l.b16 %v331
    %v1329 = vunpack.c.l.b16 %v332
    %v1330 = vunpack.c.l.b16 %v333
    %v1331 = vunpack.c.l.b16 %v334
    %v1332 = vunpack.c.l.b16 %v335
    %v1333 = vunpack.c.l.b16 %v336
    %v1334 = vunpack.c.l.b16 %v337
    %v1335 = vunpack.c.l.b16 %v338
    %v1336 = vunpack.c.l.b16 %v339
    %v1337 = vunpack.c.l.b16 %v340
    %v1338 = vunpack.c.l.b16 %v341
    %v1339 = vunpack.c.l.b16 %v342
    %v1340 = vunpack.c.l.b16 %v343
    %v1341 = vunpack.c.l.b16 %v344
    %v1342 = vunpack.c.l.b16 %v345
    %v1343 = vunpack.c.l.b16 %v346
    %v1344 = vunpack.c.l.b16 %v347
    %v1345 = vunpack.c.l.b16 %v348
    %v1346 = vunpack.c.l.b16 %v349
    %v1347 = vunpack.c.l.b16 %v350
    %v1348 = vunpack.c.l.b16 %v351
    %v1349 = vunpack.c.l.b16 %v352
    %v1350 = vunpack.c.l.b16 %v353
    %v1351 = vunpack.c.l.b16 %v354
    %v1352 = vunpack.c.l.b16 %v355
    %v1353 = vunpack.c.l.b16 %v356
    %v1354 = vunpack.c.l.b16 %v357
    %v1355 = vunpack.c.l.b16 %v358
    %v1356 = vunpack.c.l.b16 %v359
    %v1357 = vunpack.c.l.b16 %v360
    %v1358 = vunpack.c.l.b16 %v361
    %v1359 = vunpack.c.l.b16 %v362
    %v1360 = vunpack.c.l.b16 %v363
    %v1361 = vunpack.c.l.b16 %v364
    %v1362 = vunpack.c.l.b16 %v365
    %v1363 = vunpack.c.l.b16 %v366
    %v1364 = vunpack.c.l.b16 %v367
    %v1365 = vunpack.c.l.b16 %v368
    %v1366 = vunpack.c.l.b16 %v369
    %v1367 = vunpack.c.l.b16 %v370
    %v1368 = vunpack.c.l.b16 %v371
    %v1369 = vunpack.c.l.b16 %v372
    %v1370 = vunpack.c.l.b16 %v373
    %v1371 = vunpack.c.l.b16 %v374
    %v1372 = vunpack.c.l.b16 %v375
    %v1373 = vunpack.c.l.b16 %v376
    %v1374 = vunpack.c.l.b16 %v377
    %v1375 = vunpack.c.l.b16 %v378
    %v1376 = vunpack.c.l.b16 %v379
    %v1377 = vunpack.c.l.b16 %v380
    %v1378 = vunpack.c.l.b16 %v381
    %v1379 = vunpack.c.l.b16 %v382
    %v1380 = vunpack.c.l.b16 %v383
    %v1381 = vunpack.c.l.b16 %v384
    %v1382 = vunpack.c.l.b16 %v385
    %v1383 = vunpack.c.l.b16 %v386
    %v1384 = vunpack.c.l.b16 %v387
    %v1385 = vunpack.c.l.b16 %v388
    %v1386 = vunpack.c.l.b16 %v389
    %v1387 = vunpack.c.l.b16 %v390
    %v1388 = vunpack.c.l.b16 %v391
    %v1389 = vunpack.c.l.b16 %v392
    %v1390 = vunpack.c.l.b16 %v393
    %v1391 = vunpack.c.l.b16 %v394
    %v1392 = vunpack.c.l.b16 %v395
    %v1393 = vunpack.c.l.b16 %v396
    %v1394 = vunpack.c.l.b16 %v397
    %v1395 = vunpack.c.l.b16 %v398
    %v1396 = vunpack.c.l.b16 %v399
    %v1397 = vunpack.c.l.b16 %v400
    %v1398 = vunpack.c.l.b16 %v401
    %v1399 = vunpack.c.l.b16 %v402
    %v1400 = vunpack.c.l.b16 %v403
    %v1401 = vunpack.c.l.b16 %v404
    %v1402 = vunpack.c.l.b16 %v405
    %v1403 = vunpack.c.l.b16 %v406
    %v1404 = vunpack.c.l.b16 %v407
    %v1405 = vunpack.c.l.b16 %v408
    %v1406 = vunpack.c.l.b16 %v409
    %v1407 = vunpack.c.l.b16 %v410
    %v1408 = vunpack.c.l.b16 %v411
    %v1409 = vunpack.c.l.b16 %v412
    %v1410 = vunpack.c.l.b16 %v413
    %v1411 = vunpack.c.l.b16 %v414
    %v1412 = vunpack.c.l.b16 %v415
    %v1413 = vunpack.c.l.b16 %v416
    %v1414 = vunpack.c.l.b16 %v417
    %v1415 = vunpack.c.l.b16 %v418
    %v1416 = vunpack.c.l.b16 %v419
    %v1417 = vunpack.c.l.b16 %v420
    %v1418 = vunpack.c.l.b16 %v421
    %v1419 = vunpack.c.l.b16 %v422
    %v1420 = vunpack.c.l.b16 %v423
    %v1421 = vunpack.c.l.b16 %v424
    %v1422 = vunpack.c.l.b16 %v425
    %v1423 = vunpack.c.l.b16 %v426
    %v1424 = vunpack.c.l.b16 %v427
    %v1425 = vunpack.c.l.b16 %v428
    %v1426 = vunpack.c.l.b16 %v429
    %v1427 = vunpack.c.l.b16 %v430
    %v1428 = vunpack.c.l.b16 %v431
    %v1429 = vunpack.c.l.b16 %v432
    %v1430 = vunpack.c.l.b16 %v433
    %v1431 = vpack.c.b16 %v1032, %v1031
    %v1432 = vpack.c.b16 %v1034, %v1033
    %v1433 = vpack.c.b16 %v1036, %v1035
    %v1434 = vpack.c.b16 %v1038, %v1037
    %v1435 = vpack.c.b16 %v1040, %v1039
    %v1436 = vpack.c.b16 %v1042, %v1041
    %v1437 = vpack.c.b16 %v1044, %v1043
    %v1438 = vpack.c.b16 %v1046, %v1045
    %v1439 = vpack.c.b16 %v1048, %v1047
    %v1440 = vpack.c.b16 %v1050, %v1049
    %v1441 = vpack.c.b16 %v1052, %v1051
    %v1442 = vpack.c.b16 %v1054, %v1053
    %v1443 = vpack.c.b16 %v1056, %v1055
    %v1444 = vpack.c.b16 %v1058, %v1057
    %v1445 = vpack.c.b16 %v1060, %v1059
    %v1446 = vpack.c.b16 %v1062, %v1061
    %v1447 = vpack.c.b16 %v1064, %v1063
    %v1448 = vpack.c.b16 %v1066, %v1065
    %v1449 = vpack.c.b16 %v1068, %v1067
    %v1450 = vpack.c.b16 %v1070, %v1069
    %v1451 = vpack.c.b16 %v1072, %v1071
    %v1452 = vpack.c.b16 %v1074, %v1073
    %v1453 = vpack.c.b16 %v1076, %v1075
    %v1454 = vpack.c.b16 %v1078, %v1077
    %v1455 = vpack.c.b16 %v1080, %v1079
    %v1456 = vpack.c.b16 %v1082, %v1081
    %v1457 = vpack.c.b16 %v1084, %v1083
    %v1458 = vpack.c.b16 %v1086, %v1085
    %v1459 = vpack.c.b16 %v1088, %v1087
    %v1460 = vpack.c.b16 %v1090, %v1089
    %v1461 = vpack.c.b16 %v1092, %v1091
    %v1462 = vpack.c.b16 %v1094, %v1093
    %v1463 = vpack.c.b16 %v1096, %v1095
    %v1464 = vpack.c.b16 %v1098, %v1097
    %v1465 = vpack.c.b16 %v1100, %v1099
    %v1466 = vpack.c.b16 %v1102, %v1101
    %v1467 = vpack.c.b16 %v1104, %v1103
    %v1468 = vpack.c.b16 %v1106, %v1105
    %v1469 = vpack.c.b16 %v1108, %v1107
    %v1470 = vpack.c.b16 %v1110, %v1109
    %v1471 = vpack.c.b16 %v1112, %v1111
    %v1472 = vpack.c.b16 %v1114, %v1113
    %v1473 = vpack.c.b16 %v1116, %v1115
    %v1474 = vpack.c.b16 %v1118, %v1117
    %v1475 = vpack.c.b16 %v1120, %v1119
    %v1476 = vpack.c.b16 %v1122, %v1121
    %v1477 = vpack.c.b16 %v1124, %v1123
    %v1478 = vpack.c.b16 %v1126, %v1125
    %v1479 = vpack.c.b16 %v1128, %v1127
    %v1480 = vpack.c.b16 %v1130, %v1129
    %v1481 = vpack.c.b16 %v1132, %v1131
    %v1482 = vpack.c.b16 %v1134, %v1133
    %v1483 = vpack.c.b16 %v1136, %v1135
    %v1484 = vpack.c.b16 %v1138, %v1137
    %v1485 = vpack.c.b16 %v1140, %v1139
    %v1486 = vpack.c.b16 %v1142, %v1141
    %v1487 = vpack.c.b16 %v1144, %v1143
    %v1488 = vpack.c.b16 %v1146, %v1145
    %v1489 = vpack.c.b16 %v1148, %v1147
    %v1490 = vpack.c.b16 %v1150, %v1149
    %v1491 = vpack.c.b16 %v1152, %v1151
    %v1492 = vpack.c.b16 %v1154, %v1153
    %v1493 = vpack.c.b16 %v1156, %v1155
    %v1494 = vpack.c.b16 %v1158, %v1157
    %v1495 = vpack.c.b16 %v1160, %v1159
    %v1496 = vpack.c.b16 %v1162, %v1161
    %v1497 = vpack.c.b16 %v1164, %v1163
    %v1498 = vpack.c.b16 %v1166, %v1165
    %v1499 = vpack.c.b16 %v1168, %v1167
    %v1500 = vpack.c.b16 %v1170, %v1169
    %v1501 = vpack.c.b16 %v1172, %v1171
    %v1502 = vpack.c.b16 %v1174, %v1173
    %v1503 = vpack.c.b16 %v1176, %v1175
    %v1504 = vpack.c.b16 %v1178, %v1177
    %v1505 = vpack.c.b16 %v1180, %v1179
    %v1506 = vpack.c.b16 %v1182, %v1181
    %v1507 = vpack.c.b16 %v1184, %v1183
    %v1508 = vpack.c.b16 %v1186, %v1185
    %v1509 = vpack.c.b16 %v1188, %v1187
    %v1510 = vpack.c.b16 %v1190, %v1189
    %v1511 = vpack.c.b16 %v1192, %v1191
    %v1512 = vpack.c.b16 %v1194, %v1193
    %v1513 = vpack.c.b16 %v1196, %v1195
    %v1514 = vpack.c.b16 %v1198, %v1197
    %v1515 = vpack.c.b16 %v1200, %v1199
    %v1516 = vpack.c.b16 %v1202, %v1201
    %v1517 = vpack.c.b16 %v1204, %v1203
    %v1518 = vpack.c.b16 %v1206, %v1205
    %v1519 = vpack.c.b16 %v1208, %v1207
    %v1520 = vpack.c.b16 %v1210, %v1209
    %v1521 = vpack.c.b16 %v1212, %v1211
    %v1522 = vpack.c.b16 %v1214, %v1213
    %v1523 = vpack.c.b16 %v1216, %v1215
    %v1524 = vpack.c.b16 %v1218, %v1217
    %v1525 = vpack.c.b16 %v1220, %v1219
    %v1526 = vpack.c.b16 %v1222, %v1221
    %v1527 = vpack.c.b16 %v1224, %v1223
    %v1528 = vpack.c.b16 %v1226, %v1225
    %v1529 = vpack.c.b16 %v1228, %v1227
    %v1530 = vpack.c.b16 %v1230, %v1229
    %v1531 = vpack.c.b16 %v1232, %v1231
    %v1532 = vpack.c.b16 %v1234, %v1233
    %v1533 = vpack.c.b16 %v1236, %v1235
    %v1534 = vpack.c.b16 %v1238, %v1237
    %v1535 = vpack.c.b16 %v1240, %v1239
    %v1536 = vpack.c.b16 %v1242, %v1241
    %v1537 = vpack.c.b16 %v1244, %v1243
    %v1538 = vpack.c.b16 %v1246, %v1245
    %v1539 = vpack.c.b16 %v1248, %v1247
    %v1540 = vpack.c.b16 %v1250, %v1249
    %v1541 = vpack.c.b16 %v1252, %v1251
    %v1542 = vpack.c.b16 %v1254, %v1253
    %v1543 = vpack.c.b16 %v1256, %v1255
    %v1544 = vpack.c.b16 %v1258, %v1257
    %v1545 = vpack.c.b16 %v1260, %v1259
    %v1546 = vpack.c.b16 %v1262, %v1261
    %v1547 = vpack.c.b16 %v1264, %v1263
    %v1548 = vpack.c.b16 %v1266, %v1265
    %v1549 = vpack.c.b16 %v1268, %v1267
    %v1550 = vpack.c.b16 %v1270, %v1269
    %v1551 = vpack.c.b16 %v1272, %v1271
    %v1552 = vpack.c.b16 %v1274, %v1273
    %v1553 = vpack.c.b16 %v1276, %v1275
    %v1554 = vpack.c.b16 %v1278, %v1277
    %v1555 = vpack.c.b16 %v1280, %v1279
    %v1556 = vpack.c.b16 %v1282, %v1281
    %v1557 = vpack.c.b16 %v1284, %v1283
    %v1558 = vpack.c.b16 %v1286, %v1285
    %v1559 = vpack.c.b16 %v1288, %v1287
    %v1560 = vpack.c.b16 %v1290, %v1289
    %v1561 = vpack.c.b16 %v1292, %v1291
    %v1562 = vpack.c.b16 %v1294, %v1293
    %v1563 = vpack.c.b16 %v1296, %v1295
    %v1564 = vpack.c.b16 %v1298, %v1297
    %v1565 = vpack.c.b16 %v1300, %v1299
    %v1566 = vpack.c.b16 %v1302, %v1301
    %v1567 = vpack.c.b16 %v1304, %v1303
    %v1568 = vpack.c.b16 %v1306, %v1305
    %v1569 = vpack.c.b16 %v1308, %v1307
    %v1570 = vpack.c.b16 %v1310, %v1309
    %v1571 = vpack.c.b16 %v1312, %v1311
    %v1572 = vpack.c.b16 %v1314, %v1313
    %v1573 = vpack.c.b16 %v1316, %v1315
    %v1574 = vpack.c.b16 %v1318, %v1317
    %v1575 = vpack.c.b16 %v1320, %v1319
    %v1576 = vpack.c.b16 %v1322, %v1321
    %v1577 = vpack.c.b16 %v1324, %v1323
    %v1578 = vpack.c.b16 %v1326, %v1325
    %v1579 = vpack.c.b16 %v1328, %v1327
    %v1580 = vpack.c.b16 %v1330, %v1329
    %v1581 = vpack.c.b16 %v1332, %v1331
    %v1582 = vpack.c.b16 %v1334, %v1333
    %v1583 = vpack.c.b16 %v1336, %v1335
    %v1584 = vpack.c.b16 %v1338, %v1337
    %v1585 = vpack.c.b16 %v1340, %v1339
    %v1586 = vpack.c.b16 %v1342, %v1341
    %v1587 = vpack.c.b16 %v1344, %v1343
    %v1588 = vpack.c.b16 %v1346, %v1345
    %v1589 = vpack.c.b16 %v1348, %v1347
    %v1590 = vpack.c.b16 %v1350, %v1349
    %v1591 = vpack.c.b16 %v1352, %v1351
    %v1592 = vpack.c.b16 %v1354, %v1353
    %v1593 = vpack.c.b16 %v1356, %v1355
    %v1594 = vpack.c.b16 %v1358, %v1357
    %v1595 = vpack.c.b16 %v1360, %v1359
    %v1596 = vpack.c.b16 %v1362, %v1361
    %v1597 = vpack.c.b16 %v1364, %v1363
    %v1598 = vpack.c.b16 %v1366, %v1365
    %v1599 = vpack.c.b16 %v1368, %v1367
    %v1600 = vpack.c.b16 %v1370, %v1369
    %v1601 = vpack.c.b16 %v1372, %v1371
    %v1602 = vpack.c.b16 %v1374, %v1373
    %v1603 = vpack.c.b16 %v1376, %v1375
    %v1604 = vpack.c.b16 %v1378, %v1377
    %v1605 = vpack.c.b16 %v1380, %v1379
    %v1606 = vpack.c.b16 %v1382, %v1381
    %v1607 = vpack.c.b16 %v1384, %v1383
    %v1608 = vpack.c.b16 %v1386, %v1385
    %v1609 = vpack.c.b16 %v1388, %v1387
    %v1610 = vpack.c.b16 %v1390, %v1389
    %v1611 = vpack.c.b16 %v1392, %v1391
    %v1612 = vpack.c.b16 %v1394, %v1393
    %v1613 = vpack.c.b16 %v1396, %v1395
    %v1614 = vpack.c.b16 %v1398, %v1397
    %v1615 = vpack.c.b16 %v1400, %v1399
    %v1616 = vpack.c.b16 %v1402, %v1401
    %v1617 = vpack.c.b16 %v1404, %v1403
    %v1618 = vpack.c.b16 %v1406, %v1405
    %v1619 = vpack.c.b16 %v1408, %v1407
    %v1620 = vpack.c.b16 %v1410, %v1409
    %v1621 = vpack.c.b16 %v1412, %v1411
    %v1622 = vpack.c.b16 %v1414, %v1413
    %v1623 = vpack.c.b16 %v1416, %v1415
    %v1624 = vpack.c.b16 %v1418, %v1417
    %v1625 = vpack.c.b16 %v1420, %v1419
    %v1626 = vpack.c.b16 %v1422, %v1421
    %v1627 = vpack.c.b16 %v1424, %v1423
    %v1628 = vpack.c.b16 %v1426, %v1425
    %v1629 = vpack.c.b16 %v1428, %v1427
    %v1630 = vpack.c.b16 %v1430, %v1429
    %1831 = vmatprep.subr.bf16.mxu0 0
    %1832 = vmatpush1.bf16.msra.mxu0 %v1431
    %1833 = vmatprep.subr.bf16.mxu0 0
    %1834 = vmatpush1.bf16.msra.mxu0 %v1432
    %1835 = vmatprep.subr.bf16.mxu0 0
    %1836 = vmatpush1.bf16.msra.mxu0 %v1433
    %1837 = vmatprep.subr.bf16.mxu0 0
    %1838 = vmatpush1.bf16.msra.mxu0 %v1434
    %1839 = vmatprep.subr.bf16.mxu0 0
    %1840 = vmatpush1.bf16.msra.mxu0 %v1435
    %1841 = vmatprep.subr.bf16.mxu0 0
    %1842 = vmatpush1.bf16.msra.mxu0 %v1436
    %1843 = vmatprep.subr.bf16.mxu0 0
    %1844 = vmatpush1.bf16.msra.mxu0 %v1437
    %1845 = vmatprep.subr.bf16.mxu0 0
    %1846 = vmatpush1.bf16.msra.mxu0 %v1438
    %1847 = vmatprep.subr.bf16.mxu0 0
    %1848 = vmatpush1.bf16.msra.mxu0 %v1439
    %1849 = vmatprep.subr.bf16.mxu0 0
    %1850 = vmatpush1.bf16.msra.mxu0 %v1440
    %1851 = vmatprep.subr.bf16.mxu0 0
    %1852 = vmatpush1.bf16.msra.mxu0 %v1441
    %1853 = vmatprep.subr.bf16.mxu0 0
    %1854 = vmatpush1.bf16.msra.mxu0 %v1442
    %1855 = vmatprep.subr.bf16.mxu0 0
    %1856 = vmatpush1.bf16.msra.mxu0 %v1443
    %1857 = vmatprep.subr.bf16.mxu0 0
    %1858 = vmatpush1.bf16.msra.mxu0 %v1444
    %1859 = vmatprep.subr.bf16.mxu0 0
    %1860 = vmatpush1.bf16.msra.mxu0 %v1445
    %1861 = vmatprep.subr.bf16.mxu0 0
    %1862 = vmatpush1.bf16.msra.mxu0 %v1446
    %1863 = vmatprep.mubr.bf16.mxu0 %v482
    %1864 = vmatmul.mubr.bf16.gmra.mrb[0].mxu0 %v468
    %v1865 = vpop.f32.mrb[0].mxu0
    %v1866 = vadd.f32 %v439, %v1865
    %v1867 = vpop.f32.mrb[0].mxu0
    %v1868 = vpop.f32.mrb[0].mxu0
    %v1869 = vpop.f32.mrb[0].mxu0
    %1870 = vdwg.mxu0
    %1871 = vmatprep.subr.bf16.mxu0 0
    %1872 = vmatpush1.bf16.msra.mxu0 %v1447
    %1873 = vmatprep.subr.bf16.mxu0 0
    %1874 = vmatpush1.bf16.msra.mxu0 %v1448
    %1875 = vmatprep.subr.bf16.mxu0 0
    %1876 = vmatpush1.bf16.msra.mxu0 %v1449
    %1877 = vmatprep.subr.bf16.mxu0 0
    %1878 = vmatpush1.bf16.msra.mxu0 %v1450
    %1879 = vmatprep.subr.bf16.mxu0 0
    %1880 = vmatpush1.bf16.msra.mxu0 %v1451
    %1881 = vmatprep.subr.bf16.mxu0 0
    %1882 = vmatpush1.bf16.msra.mxu0 %v1452
    %1883 = vmatprep.subr.bf16.mxu0 0
    %1884 = vmatpush1.bf16.msra.mxu0 %v1453
    %1885 = vmatprep.subr.bf16.mxu0 0
    %1886 = vmatpush1.bf16.msra.mxu0 %v1454
    %1887 = vmatprep.subr.bf16.mxu0 0
    %1888 = vmatpush1.bf16.msra.mxu0 %v1455
    %1889 = vmatprep.subr.bf16.mxu0 0
    %1890 = vmatpush1.bf16.msra.mxu0 %v1456
    %1891 = vmatprep.subr.bf16.mxu0 0
    %1892 = vmatpush1.bf16.msra.mxu0 %v1457
    %1893 = vmatprep.subr.bf16.mxu0 0
    %1894 = vmatpush1.bf16.msra.mxu0 %v1458
    %1895 = vmatprep.subr.bf16.mxu0 0
    %1896 = vmatpush1.bf16.msra.mxu0 %v1459
    %1897 = vmatprep.subr.bf16.mxu0 0
    %1898 = vmatpush1.bf16.msra.mxu0 %v1460
    %1899 = vmatprep.subr.bf16.mxu0 0
    %1900 = vmatpush1.bf16.msra.mxu0 %v1461
    %1901 = vmatprep.subr.bf16.mxu0 0
    %1902 = vmatpush1.bf16.msra.mxu0 %v1462
    %1903 = vmatprep.mubr.bf16.mxu0 %v492
    %1904 = vmatmul.mubr.bf16.gmra.mrb[0].mxu0 %v490
    %v1905 = vpop.f32.mrb[0].mxu0
    %v1906 = vadd.f32 %v1866, %v1905
    %v1907 = vpop.f32.mrb[0].mxu0
    %v1908 = vpop.f32.mrb[0].mxu0
    %v1909 = vpop.f32.mrb[0].mxu0
    %1910 = vdwg.mxu0
    %1911 = vmatprep.subr.bf16.mxu0 0
    %1912 = vmatpush1.bf16.msra.mxu0 %v1463
    %1913 = vmatprep.subr.bf16.mxu0 0
    %1914 = vmatpush1.bf16.msra.mxu0 %v1464
    %1915 = vmatprep.subr.bf16.mxu0 0
    %1916 = vmatpush1.bf16.msra.mxu0 %v1465
    %1917 = vmatprep.subr.bf16.mxu0 0
    %1918 = vmatpush1.bf16.msra.mxu0 %v1466
    %1919 = vmatprep.subr.bf16.mxu0 0
    %1920 = vmatpush1.bf16.msra.mxu0 %v1467
    %1921 = vmatprep.subr.bf16.mxu0 0
    %1922 = vmatpush1.bf16.msra.mxu0 %v1468
    %1923 = vmatprep.subr.bf16.mxu0 0
    %1924 = vmatpush1.bf16.msra.mxu0 %v1469
    %1925 = vmatprep.subr.bf16.mxu0 0
    %1926 = vmatpush1.bf16.msra.mxu0 %v1470
    %1927 = vmatprep.subr.bf16.mxu0 0
    %1928 = vmatpush1.bf16.msra.mxu0 %v1471
    %1929 = vmatprep.subr.bf16.mxu0 0
    %1930 = vmatpush1.bf16.msra.mxu0 %v1472
    %1931 = vmatprep.subr.bf16.mxu0 0
    %1932 = vmatpush1.bf16.msra.mxu0 %v1473
    %1933 = vmatprep.subr.bf16.mxu0 0
    %1934 = vmatpush1.bf16.msra.mxu0 %v1474
    %1935 = vmatprep.subr.bf16.mxu0 0
    %1936 = vmatpush1.bf16.msra.mxu0 %v1475
    %1937 = vmatprep.subr.bf16.mxu0 0
    %1938 = vmatpush1.bf16.msra.mxu0 %v1476
    %1939 = vmatprep.subr.bf16.mxu0 0
    %1940 = vmatpush1.bf16.msra.mxu0 %v1477
    %1941 = vmatprep.subr.bf16.mxu0 0
    %1942 = vmatpush1.bf16.msra.mxu0 %v1478
    %1943 = vmatprep.mubr.bf16.mxu0 %v489
    %1944 = vmatmul.mubr.bf16.gmra.mrb[0].mxu0 %v475
    %v1945 = vpop.f32.mrb[0].mxu0
    %v1946 = vadd.f32 %v1906, %v1945
    %v1947 = vpop.f32.mrb[0].mxu0
    %v1948 = vpop.f32.mrb[0].mxu0
    %v1949 = vpop.f32.mrb[0].mxu0
    %1950 = vdwg.mxu0
    %1951 = vmatprep.subr.bf16.mxu0 0
    %1952 = vmatpush1.bf16.msra.mxu0 %v1479
    %1953 = vmatprep.subr.bf16.mxu0 0
    %1954 = vmatpush1.bf16.msra.mxu0 %v1480
    %1955 = vmatprep.subr.bf16.mxu0 0
    %1956 = vmatpush1.bf16.msra.mxu0 %v1481
    %1957 = vmatprep.subr.bf16.mxu0 0
    %1958 = vmatpush1.bf16.msra.mxu0 %v1482
    %1959 = vmatprep.subr.bf16.mxu0 0
    %1960 = vmatpush1.bf16.msra.mxu0 %v1483
    %1961 = vmatprep.subr.bf16.mxu0 0
    %1962 = vmatpush1.bf16.msra.mxu0 %v1484
    %1963 = vmatprep.subr.bf16.mxu0 0
    %1964 = vmatpush1.bf16.msra.mxu0 %v1485
    %1965 = vmatprep.subr.bf16.mxu0 0
    %1966 = vmatpush1.bf16.msra.mxu0 %v1486
    %1967 = vmatprep.subr.bf16.mxu0 0
    %1968 = vmatpush1.bf16.msra.mxu0 %v1487
    %1969 = vmatprep.subr.bf16.mxu0 0
    %1970 = vmatpush1.bf16.msra.mxu0 %v1488
    %1971 = vmatprep.subr.bf16.mxu0 0
    %1972 = vmatpush1.bf16.msra.mxu0 %v1489
    %1973 = vmatprep.subr.bf16.mxu0 0
    %1974 = vmatpush1.bf16.msra.mxu0 %v1490
    %1975 = vmatprep.subr.bf16.mxu0 0
    %1976 = vmatpush1.bf16.msra.mxu0 %v1491
    %1977 = vmatprep.subr.bf16.mxu0 0
    %1978 = vmatpush1.bf16.msra.mxu0 %v1492
    %1979 = vmatprep.subr.bf16.mxu0 0
    %1980 = vmatpush1.bf16.msra.mxu0 %v1493
    %1981 = vmatprep.subr.bf16.mxu0 0
    %1982 = vmatpush1.bf16.msra.mxu0 %v1494
    %1983 = vmatprep.mubr.bf16.mxu0 %v493
    %1984 = vmatmul.mubr.bf16.gmra.mrb[0].mxu0 %v491
    %v1985 = vpop.f32.mrb[0].mxu0
    %v1986 = vadd.f32 %v1946, %v1985
    %v1987 = vpop.f32.mrb[0].mxu0
    %v1988 = vpop.f32.mrb[0].mxu0
    %v1989 = vpop.f32.mrb[0].mxu0
    %1990 = vdwg.mxu0
    %1991 = vmatprep.subr.bf16.mxu0 0
    %1992 = vmatpush1.bf16.msra.mxu0 %v1495
    %1993 = vmatprep.subr.bf16.mxu0 0
    %1994 = vmatpush1.bf16.msra.mxu0 %v1496
    %1995 = vmatprep.subr.bf16.mxu0 0
    %1996 = vmatpush1.bf16.msra.mxu0 %v1497
    %1997 = vmatprep.subr.bf16.mxu0 0
    %1998 = vmatpush1.bf16.msra.mxu0 %v1498
    %1999 = vmatprep.subr.bf16.mxu0 0
    %2000 = vmatpush1.bf16.msra.mxu0 %v1499
    %2001 = vmatprep.subr.bf16.mxu0 0
    %2002 = vmatpush1.bf16.msra.mxu0 %v1500
    %2003 = vmatprep.subr.bf16.mxu0 0
    %2004 = vmatpush1.bf16.msra.mxu0 %v1501
    %2005 = vmatprep.subr.bf16.mxu0 0
    %2006 = vmatpush1.bf16.msra.mxu0 %v1502
    %2007 = vmatprep.subr.bf16.mxu0 0
    %2008 = vmatpush1.bf16.msra.mxu0 %v1503
    %2009 = vmatprep.subr.bf16.mxu0 0
    %2010 = vmatpush1.bf16.msra.mxu0 %v1504
    %2011 = vmatprep.subr.bf16.mxu0 0
    %2012 = vmatpush1.bf16.msra.mxu0 %v1505
    %2013 = vmatprep.subr.bf16.mxu0 0
    %2014 = vmatpush1.bf16.msra.mxu0 %v1506
    %2015 = vmatprep.subr.bf16.mxu0 0
    %2016 = vmatpush1.bf16.msra.mxu0 %v1507
    %2017 = vmatprep.subr.bf16.mxu0 0
    %2018 = vmatpush1.bf16.msra.mxu0 %v1508
    %2019 = vmatprep.subr.bf16.mxu0 0
    %2020 = vmatpush1.bf16.msra.mxu0 %v1509
    %2021 = vmatprep.subr.bf16.mxu0 0
    %2022 = vmatpush1.bf16.msra.mxu0 %v1510
    %2023 = vmatprep.mubr.bf16.mxu0 %v531
    %2024 = vmatmul.mubr.bf16.gmra.mrb[0].mxu0 %v517
    %v2025 = vpop.f32.mrb[0].mxu0
    %v2026 = vadd.f32 %v1986, %v2025
    %v2027 = vpop.f32.mrb[0].mxu0
    %v2028 = vpop.f32.mrb[0].mxu0
    %v2029 = vpop.f32.mrb[0].mxu0
    %2030 = vdwg.mxu0
    %2031 = vmatprep.subr.bf16.mxu0 0
    %2032 = vmatpush1.bf16.msra.mxu0 %v1511
    %2033 = vmatprep.subr.bf16.mxu0 0
    %2034 = vmatpush1.bf16.msra.mxu0 %v1512
    %2035 = vmatprep.subr.bf16.mxu0 0
    %2036 = vmatpush1.bf16.msra.mxu0 %v1513
    %2037 = vmatprep.subr.bf16.mxu0 0
    %2038 = vmatpush1.bf16.msra.mxu0 %v1514
    %2039 = vmatprep.subr.bf16.mxu0 0
    %2040 = vmatpush1.bf16.msra.mxu0 %v1515
    %2041 = vmatprep.subr.bf16.mxu0 0
    %2042 = vmatpush1.bf16.msra.mxu0 %v1516
    %2043 = vmatprep.subr.bf16.mxu0 0
    %2044 = vmatpush1.bf16.msra.mxu0 %v1517
    %2045 = vmatprep.subr.bf16.mxu0 0
    %2046 = vmatpush1.bf16.msra.mxu0 %v1518
    %2047 = vmatprep.subr.bf16.mxu0 0
    %2048 = vmatpush1.bf16.msra.mxu0 %v1519
    %2049 = vmatprep.subr.bf16.mxu0 0
    %2050 = vmatpush1.bf16.msra.mxu0 %v1520
    %2051 = vmatprep.subr.bf16.mxu0 0
    %2052 = vmatpush1.bf16.msra.mxu0 %v1521
    %2053 = vmatprep.subr.bf16.mxu0 0
    %2054 = vmatpush1.bf16.msra.mxu0 %v1522
    %2055 = vmatprep.subr.bf16.mxu0 0
    %2056 = vmatpush1.bf16.msra.mxu0 %v1523
    %2057 = vmatprep.subr.bf16.mxu0 0
    %2058 = vmatpush1.bf16.msra.mxu0 %v1524
    %2059 = vmatprep.subr.bf16.mxu0 0
    %2060 = vmatpush1.bf16.msra.mxu0 %v1525
    %2061 = vmatprep.subr.bf16.mxu0 0
    %2062 = vmatpush1.bf16.msra.mxu0 %v1526
    %2063 = vmatprep.mubr.bf16.mxu0 %v541
    %2064 = vmatmul.mubr.bf16.gmra.mrb[0].mxu0 %v539
    %v2065 = vpop.f32.mrb[0].mxu0
    %v2066 = vadd.f32 %v2026, %v2065
    %v2067 = vpop.f32.mrb[0].mxu0
    %v2068 = vpop.f32.mrb[0].mxu0
    %v2069 = vpop.f32.mrb[0].mxu0
    %2070 = vdwg.mxu0
    %2071 = vmatprep.subr.bf16.mxu0 0
    %2072 = vmatpush1.bf16.msra.mxu0 %v1527
    %2073 = vmatprep.subr.bf16.mxu0 0
    %2074 = vmatpush1.bf16.msra.mxu0 %v1528
    %2075 = vmatprep.subr.bf16.mxu0 0
    %2076 = vmatpush1.bf16.msra.mxu0 %v1529
    %2077 = vmatprep.subr.bf16.mxu0 0
    %2078 = vmatpush1.bf16.msra.mxu0 %v1530
    %2079 = vmatprep.subr.bf16.mxu0 0
    %2080 = vmatpush1.bf16.msra.mxu0 %v1531
    %2081 = vmatprep.subr.bf16.mxu0 0
    %2082 = vmatpush1.bf16.msra.mxu0 %v1532
    %2083 = vmatprep.subr.bf16.mxu0 0
    %2084 = vmatpush1.bf16.msra.mxu0 %v1533
    %2085 = vmatprep.subr.bf16.mxu0 0
    %2086 = vmatpush1.bf16.msra.mxu0 %v1534
    %2087 = vmatprep.subr.bf16.mxu0 0
    %2088 = vmatpush1.bf16.msra.mxu0 %v1535
    %2089 = vmatprep.subr.bf16.mxu0 0
    %2090 = vmatpush1.bf16.msra.mxu0 %v1536
    %2091 = vmatprep.subr.bf16.mxu0 0
    %2092 = vmatpush1.bf16.msra.mxu0 %v1537
    %2093 = vmatprep.subr.bf16.mxu0 0
    %2094 = vmatpush1.bf16.msra.mxu0 %v1538
    %2095 = vmatprep.subr.bf16.mxu0 0
    %2096 = vmatpush1.bf16.msra.mxu0 %v1539
    %2097 = vmatprep.subr.bf16.mxu0 0
    %2098 = vmatpush1.bf16.msra.mxu0 %v1540
    %2099 = vmatprep.subr.bf16.mxu0 0
    %2100 = vmatpush1.bf16.msra.mxu0 %v1541
    %2101 = vmatprep.subr.bf16.mxu0 0
    %2102 = vmatpush1.bf16.msra.mxu0 %v1542
    %2103 = vmatprep.mubr.bf16.mxu0 %v538
    %2104 = vmatmul.mubr.bf16.gmra.mrb[0].mxu0 %v524
    %v2105 = vpop.f32.mrb[0].mxu0
    %v2106 = vadd.f32 %v2066, %v2105
    %v2107 = vpop.f32.mrb[0].mxu0
    %v2108 = vpop.f32.mrb[0].mxu0
    %v2109 = vpop.f32.mrb[0].mxu0
    %2110 = vdwg.mxu0
    %2111 = vmatprep.subr.bf16.mxu0 0
    %2112 = vmatpush1.bf16.msra.mxu0 %v1543
    %2113 = vmatprep.subr.bf16.mxu0 0
    %2114 = vmatpush1.bf16.msra.mxu0 %v1544
    %2115 = vmatprep.subr.bf16.mxu0 0
    %2116 = vmatpush1.bf16.msra.mxu0 %v1545
    %2117 = vmatprep.subr.bf16.mxu0 0
    %2118 = vmatpush1.bf16.msra.mxu0 %v1546
    %2119 = vmatprep.subr.bf16.mxu0 0
    %2120 = vmatpush1.bf16.msra.mxu0 %v1547
    %2121 = vmatprep.subr.bf16.mxu0 0
    %2122 = vmatpush1.bf16.msra.mxu0 %v1548
    %2123 = vmatprep.subr.bf16.mxu0 0
    %2124 = vmatpush1.bf16.msra.mxu0 %v1549
    %2125 = vmatprep.subr.bf16.mxu0 0
    %2126 = vmatpush1.bf16.msra.mxu0 %v1550
    %2127 = vmatprep.subr.bf16.mxu0 0
    %2128 = vmatpush1.bf16.msra.mxu0 %v1551
    %2129 = vmatprep.subr.bf16.mxu0 0
    %2130 = vmatpush1.bf16.msra.mxu0 %v1552
    %2131 = vmatprep.subr.bf16.mxu0 0
    %2132 = vmatpush1.bf16.msra.mxu0 %v1553
    %2133 = vmatprep.subr.bf16.mxu0 0
    %2134 = vmatpush1.bf16.msra.mxu0 %v1554
    %2135 = vmatprep.subr.bf16.mxu0 0
    %2136 = vmatpush1.bf16.msra.mxu0 %v1555
    %2137 = vmatprep.subr.bf16.mxu0 0
    %2138 = vmatpush1.bf16.msra.mxu0 %v1556
    %2139 = vmatprep.subr.bf16.mxu0 0
    %2140 = vmatpush1.bf16.msra.mxu0 %v1557
    %2141 = vmatprep.subr.bf16.mxu0 0
    %2142 = vmatpush1.bf16.msra.mxu0 %v1558
    %2143 = vmatprep.mubr.bf16.mxu0 %v542
    %2144 = vmatmul.mubr.bf16.gmra.mrb[0].mxu0 %v540
    %v2145 = vpop.f32.mrb[0].mxu0
    %v2146 = vadd.f32 %v2106, %v2145
    %v2147 = vpop.f32.mrb[0].mxu0
    %v2148 = vpop.f32.mrb[0].mxu0
    %v2149 = vpop.f32.mrb[0].mxu0
    %2150 = vdwg.mxu0
    %2151 = vmatprep.subr.bf16.mxu0 0
    %2152 = vmatpush1.bf16.msra.mxu0 %v1559
    %2153 = vmatprep.subr.bf16.mxu0 0
    %2154 = vmatpush1.bf16.msra.mxu0 %v1560
    %2155 = vmatprep.subr.bf16.mxu0 0
    %2156 = vmatpush1.bf16.msra.mxu0 %v1561
    %2157 = vmatprep.subr.bf16.mxu0 0
    %2158 = vmatpush1.bf16.msra.mxu0 %v1562
    %2159 = vmatprep.subr.bf16.mxu0 0
    %2160 = vmatpush1.bf16.msra.mxu0 %v1563
    %2161 = vmatprep.subr.bf16.mxu0 0
    %2162 = vmatpush1.bf16.msra.mxu0 %v1564
    %2163 = vmatprep.subr.bf16.mxu0 0
    %2164 = vmatpush1.bf16.msra.mxu0 %v1565
    %2165 = vmatprep.subr.bf16.mxu0 0
    %2166 = vmatpush1.bf16.msra.mxu0 %v1566
    %2167 = vmatprep.subr.bf16.mxu0 0
    %2168 = vmatpush1.bf16.msra.mxu0 %v1567
    %2169 = vmatprep.subr.bf16.mxu0 0
    %2170 = vmatpush1.bf16.msra.mxu0 %v1568
    %2171 = vmatprep.subr.bf16.mxu0 0
    %2172 = vmatpush1.bf16.msra.mxu0 %v1569
    %2173 = vmatprep.subr.bf16.mxu0 0
    %2174 = vmatpush1.bf16.msra.mxu0 %v1570
    %2175 = vmatprep.subr.bf16.mxu0 0
    %2176 = vmatpush1.bf16.msra.mxu0 %v1571
    %2177 = vmatprep.subr.bf16.mxu0 0
    %2178 = vmatpush1.bf16.msra.mxu0 %v1572
    %2179 = vmatprep.subr.bf16.mxu0 0
    %2180 = vmatpush1.bf16.msra.mxu0 %v1573
    %2181 = vmatprep.subr.bf16.mxu0 0
    %2182 = vmatpush1.bf16.msra.mxu0 %v1574
    %2183 = vmatprep.mubr.bf16.mxu0 %v580
    %2184 = vmatmul.mubr.bf16.gmra.mrb[0].mxu0 %v566
    %v2185 = vpop.f32.mrb[0].mxu0
    %v2186 = vadd.f32 %v2146, %v2185
    %v2187 = vpop.f32.mrb[0].mxu0
    %v2188 = vpop.f32.mrb[0].mxu0
    %v2189 = vpop.f32.mrb[0].mxu0
    %2190 = vdwg.mxu0
    %2191 = vmatprep.subr.bf16.mxu0 0
    %2192 = vmatpush1.bf16.msra.mxu0 %v1575
    %2193 = vmatprep.subr.bf16.mxu0 0
    %2194 = vmatpush1.bf16.msra.mxu0 %v1576
    %2195 = vmatprep.subr.bf16.mxu0 0
    %2196 = vmatpush1.bf16.msra.mxu0 %v1577
    %2197 = vmatprep.subr.bf16.mxu0 0
    %2198 = vmatpush1.bf16.msra.mxu0 %v1578
    %2199 = vmatprep.subr.bf16.mxu0 0
    %2200 = vmatpush1.bf16.msra.mxu0 %v1579
    %2201 = vmatprep.subr.bf16.mxu0 0
    %2202 = vmatpush1.bf16.msra.mxu0 %v1580
    %2203 = vmatprep.subr.bf16.mxu0 0
    %2204 = vmatpush1.bf16.msra.mxu0 %v1581
    %2205 = vmatprep.subr.bf16.mxu0 0
    %2206 = vmatpush1.bf16.msra.mxu0 %v1582
    %2207 = vmatprep.subr.bf16.mxu0 0
    %2208 = vmatpush1.bf16.msra.mxu0 %v1583
    %2209 = vmatprep.subr.bf16.mxu0 0
    %2210 = vmatpush1.bf16.msra.mxu0 %v1584
    %2211 = vmatprep.subr.bf16.mxu0 0
    %2212 = vmatpush1.bf16.msra.mxu0 %v1585
    %2213 = vmatprep.subr.bf16.mxu0 0
    %2214 = vmatpush1.bf16.msra.mxu0 %v1586
    %2215 = vmatprep.subr.bf16.mxu0 0
    %2216 = vmatpush1.bf16.msra.mxu0 %v1587
    %2217 = vmatprep.subr.bf16.mxu0 0
    %2218 = vmatpush1.bf16.msra.mxu0 %v1588
    %2219 = vmatprep.subr.bf16.mxu0 0
    %2220 = vmatpush1.bf16.msra.mxu0 %v1589
    %2221 = vmatprep.subr.bf16.mxu0 0
    %2222 = vmatpush1.bf16.msra.mxu0 %v1590
    %2223 = vmatprep.mubr.bf16.mxu0 %v590
    %2224 = vmatmul.mubr.bf16.gmra.mrb[0].mxu0 %v588
    %v2225 = vpop.f32.mrb[0].mxu0
    %v2226 = vadd.f32 %v2186, %v2225
    %v2227 = vpop.f32.mrb[0].mxu0
    %v2228 = vpop.f32.mrb[0].mxu0
    %v2229 = vpop.f32.mrb[0].mxu0
    %2230 = vdwg.mxu0
    %2231 = vmatprep.subr.bf16.mxu0 0
    %2232 = vmatpush1.bf16.msra.mxu0 %v1591
    %2233 = vmatprep.subr.bf16.mxu0 0
    %2234 = vmatpush1.bf16.msra.mxu0 %v1592
    %2235 = vmatprep.subr.bf16.mxu0 0
    %2236 = vmatpush1.bf16.msra.mxu0 %v1593
    %2237 = vmatprep.subr.bf16.mxu0 0
    %2238 = vmatpush1.bf16.msra.mxu0 %v1594
    %2239 = vmatprep.subr.bf16.mxu0 0
    %2240 = vmatpush1.bf16.msra.mxu0 %v1595
    %2241 = vmatprep.subr.bf16.mxu0 0
    %2242 = vmatpush1.bf16.msra.mxu0 %v1596
    %2243 = vmatprep.subr.bf16.mxu0 0
    %2244 = vmatpush1.bf16.msra.mxu0 %v1597
    %2245 = vmatprep.subr.bf16.mxu0 0
    %2246 = vmatpush1.bf16.msra.mxu0 %v1598
    %2247 = vmatprep.subr.bf16.mxu0 0
    %2248 = vmatpush1.bf16.msra.mxu0 %v1599
    %2249 = vmatprep.subr.bf16.mxu0 0
    %2250 = vmatpush1.bf16.msra.mxu0 %v1600
    %2251 = vmatprep.subr.bf16.mxu0 0
    %2252 = vmatpush1.bf16.msra.mxu0 %v1601
    %2253 = vmatprep.subr.bf16.mxu0 0
    %2254 = vmatpush1.bf16.msra.mxu0 %v1602
    %2255 = vmatprep.subr.bf16.mxu0 0
    %2256 = vmatpush1.bf16.msra.mxu0 %v1603
    %2257 = vmatprep.subr.bf16.mxu0 0
    %2258 = vmatpush1.bf16.msra.mxu0 %v1604
    %2259 = vmatprep.subr.bf16.mxu0 0
    %2260 = vmatpush1.bf16.msra.mxu0 %v1605
    %2261 = vmatprep.subr.bf16.mxu0 0
    %2262 = vmatpush1.bf16.msra.mxu0 %v1606
    %2263 = vmatprep.mubr.bf16.mxu0 %v587
    %2264 = vmatmul.mubr.bf16.gmra.mrb[0].mxu0 %v573
    %v2265 = vpop.f32.mrb[0].mxu0
    %v2266 = vadd.f32 %v2226, %v2265
    %v2267 = vpop.f32.mrb[0].mxu0
    %v2268 = vpop.f32.mrb[0].mxu0
    %v2269 = vpop.f32.mrb[0].mxu0
    %2270 = vdwg.mxu0
    %2271 = vmatprep.subr.bf16.mxu0 0
    %2272 = vmatpush1.bf16.msra.mxu0 %v1607
    %2273 = vmatprep.subr.bf16.mxu0 0
    %2274 = vmatpush1.bf16.msra.mxu0 %v1608
    %2275 = vmatprep.subr.bf16.mxu0 0
    %2276 = vmatpush1.bf16.msra.mxu0 %v1609
    %2277 = vmatprep.subr.bf16.mxu0 0
    %2278 = vmatpush1.bf16.msra.mxu0 %v1610
    %2279 = vmatprep.subr.bf16.mxu0 0
    %2280 = vmatpush1.bf16.msra.mxu0 %v1611
    %2281 = vmatprep.subr.bf16.mxu0 0
    %2282 = vmatpush1.bf16.msra.mxu0 %v1612
    %2283 = vmatprep.subr.bf16.mxu0 0
    %2284 = vmatpush1.bf16.msra.mxu0 %v1613
    %2285 = vmatprep.subr.bf16.mxu0 0
    %2286 = vmatpush1.bf16.msra.mxu0 %v1614
    %2287 = vmatprep.subr.bf16.mxu0 0
    %2288 = vmatpush1.bf16.msra.mxu0 %v1615
    %2289 = vmatprep.subr.bf16.mxu0 0
    %2290 = vmatpush1.bf16.msra.mxu0 %v1616
    %2291 = vmatprep.subr.bf16.mxu0 0
    %2292 = vmatpush1.bf16.msra.mxu0 %v1617
    %2293 = vmatprep.subr.bf16.mxu0 0
    %2294 = vmatpush1.bf16.msra.mxu0 %v1618
    %2295 = vmatprep.subr.bf16.mxu0 0
    %2296 = vmatpush1.bf16.msra.mxu0 %v1619
    %2297 = vmatprep.subr.bf16.mxu0 0
    %2298 = vmatpush1.bf16.msra.mxu0 %v1620
    %2299 = vmatprep.subr.bf16.mxu0 0
    %2300 = vmatpush1.bf16.msra.mxu0 %v1621
    %2301 = vmatprep.subr.bf16.mxu0 0
    %2302 = vmatpush1.bf16.msra.mxu0 %v1622
    %2303 = vmatprep.mubr.bf16.mxu0 %v591
    %2304 = vmatmul.mubr.bf16.gmra.mrb[0].mxu0 %v589
    %v2305 = vpop.f32.mrb[0].mxu0
    %v2306 = vadd.f32 %v2266, %v2305
    %v2307 = vpop.f32.mrb[0].mxu0
    %v2308 = vpop.f32.mrb[0].mxu0
    %v2309 = vpop.f32.mrb[0].mxu0
    %2310 = vdwg.mxu0
    %2311 = vmatprep.subr.bf16.mxu0 0
    %2312 = vmatpush1.bf16.msra.mxu0 %v1623
    %2313 = vmatprep.subr.bf16.mxu0 0
    %2314 = vmatpush1.bf16.msra.mxu0 %v1624
    %2315 = vmatprep.subr.bf16.mxu0 0
    %2316 = vmatpush1.bf16.msra.mxu0 %v1625
    %2317 = vmatprep.subr.bf16.mxu0 0
    %2318 = vmatpush1.bf16.msra.mxu0 %v1626
    %2319 = vmatprep.subr.bf16.mxu0 0
    %2320 = vmatpush1.bf16.msra.mxu0 %v1627
    %2321 = vmatprep.subr.bf16.mxu0 0
    %2322 = vmatpush1.bf16.msra.mxu0 %v1628
    %2323 = vmatprep.subr.bf16.mxu0 0
    %2324 = vmatpush1.bf16.msra.mxu0 %v1629
    %2325 = vmatprep.subr.bf16.mxu0 0
    %2326 = vmatpush1.bf16.msra.mxu0 %v1630
    %2327 = vmatprep.subr.bf16.mxu0 0
    %2328 = vmatpush1.bf16.msra.mxu0 0
    %2329 = vmatprep.subr.bf16.mxu0 0
    %2330 = vmatpush1.bf16.msra.mxu0 0
    %2331 = vmatprep.subr.bf16.mxu0 0
    %2332 = vmatpush1.bf16.msra.mxu0 0
    %2333 = vmatprep.subr.bf16.mxu0 0
    %2334 = vmatpush1.bf16.msra.mxu0 0
    %2335 = vmatprep.subr.bf16.mxu0 0
    %2336 = vmatpush1.bf16.msra.mxu0 0
    %2337 = vmatprep.subr.bf16.mxu0 0
    %2338 = vmatpush1.bf16.msra.mxu0 0
    %2339 = vmatprep.subr.bf16.mxu0 0
    %2340 = vmatpush1.bf16.msra.mxu0 0
    %2341 = vmatprep.subr.bf16.mxu0 0
    %2342 = vmatpush1.bf16.msra.mxu0 0
    %2343 = vmatprep.mubr.bf16.mxu0 0
    %2344 = vmatmul.mubr.bf16.gmra.mrb[0].mxu0 %v605
    %v2345 = vpop.f32.mrb[0].mxu0
    %v2346 = vadd.f32 %v2306, %v2345
    %v2347 = vpop.f32.mrb[0].mxu0
    %v2348 = vpop.f32.mrb[0].mxu0
    %v2349 = vpop.f32.mrb[0].mxu0
    %2350 = vdwg.mxu0
    %2351 = vst [vmem:[#allocation5] sm:$0x3] %v2346
    // Predicated region
    $region18: #{inception_aux_forward.3} parent=1 // pred_check
      _
    $region19: #{inception_aux_forward.3} parent=1 // pred_check_branch
      %2353 = sbr.rel (0) target = $region21
    $region20: #{inception_aux_forward.3} parent=1 // pred_region
      %s2355 = ssub.s32 32, 32
      %2356 = vsyncadd [#allocation4], %s2355
      %s2358 = sshll.u32 [#allocation5], 4
      %s2359 = int_to_ptr.vmem [resolvable:$true] %s2358
      %2361 = dma.vmem_to_hbm [thread:$0]  %s2359, 32, %s3, [#allocation4]
    $region21: #{inception_aux_forward.3} parent=1 // pred_fallthru
      _
    // Predicated region
    $region22: #{inception_aux_forward.3} parent=1 // pred_check
      _
    $region23: #{inception_aux_forward.3} parent=1 // pred_check_branch
      %2363 = sbr.rel (0) target = $region25
    $region24: #{inception_aux_forward.3} parent=1 // pred_region
      %2364 = dma.done [#allocation4], 32
    $region25: #{inception_aux_forward.3} parent=1 // pred_fallthru
      _
    %2365 = vsyncpa [#allocation3], 1
    %2366 = vsyncpa [#allocation4], 1

</llo_original>
